<compile_context>
chip_gen: v7x
topology: tpu7x:2x2x1
jax: 0.10.0
libtpu: 0.0.40
codegen_flags: <defaults>
</compile_context>

<pallas_src>
import jax
import jax.numpy as jnp
from jax.experimental import pallas as pl
from jax.experimental.pallas import tpu as pltpu


# ---------------------------------------------------------------------------
# Kernels
# ---------------------------------------------------------------------------
def gcn_layer1_kernel(a_ref, x_ref, dr_ref, dc_ref, w1_ref, b1_ref, w2_ref,
                      m_ref, acc_ref):
    """M = dinv * ( relu( D^-1/2 (A+I) D^-1/2 X W1 + b1 ) @ W2 ), one row tile.

    grid = (row_tiles, k_tiles); k is the reduction over source nodes.
    acc_ref is a [tm, C_in] f32 accumulator for (A+I) @ (dinv * X).
    A arrives as int8 and is cast to bf16 in-register (VPU work hidden under
    the A-tile DMA); the MXU dot accumulates in f32.
    """
    k = pl.program_id(1)

    @pl.when(k == 0)
    def _():
        acc_ref[...] = jnp.zeros_like(acc_ref)

    # Fused column-side D^-1/2: scale source-node features, feed bf16 to MXU.
    xs = (dc_ref[...] * x_ref[...]).astype(jnp.bfloat16)
    a_bf16 = a_ref[...].astype(jnp.bfloat16)
    acc_ref[...] += jnp.dot(a_bf16, xs, preferred_element_type=jnp.float32)

    @pl.when(k == pl.num_programs(1) - 1)
    def _():
        agg = dr_ref[...] * acc_ref[...]                       # layer-1 row D^-1/2
        h = jnp.dot(agg, w1_ref[...], preferred_element_type=jnp.float32)
        h = jnp.maximum(h + b1_ref[...], 0.0)                  # ReLU (f32 VPU)
        m = jnp.dot(h, w2_ref[...], preferred_element_type=jnp.float32)
        # Pre-apply layer-2's column-side D^-1/2 and store bf16: pass 2 then
        # streams only A plus this already-normalized slab.
        m_ref[...] = (dr_ref[...] * m).astype(jnp.bfloat16)


def gcn_layer2_kernel(a_ref, m_ref, dr_ref, b2_ref, o_ref, acc_ref):
    """log_softmax( D^-1/2 (A+I) M + b2 ) for one row tile (M pre-scaled)."""
    k = pl.program_id(1)

    @pl.when(k == 0)
    def _():
        acc_ref[...] = jnp.zeros_like(acc_ref)

    a_bf16 = a_ref[...].astype(jnp.bfloat16)
    acc_ref[...] += jnp.dot(a_bf16, m_ref[...],
                            preferred_element_type=jnp.float32)

    @pl.when(k == pl.num_programs(1) - 1)
    def _():
        o = dr_ref[...] * acc_ref[...] + b2_ref[...]           # row-side D^-1/2
        # log_softmax along the feature axis (dim=1), f32 throughout.
        mx = jnp.max(o, axis=1, keepdims=True)
        z = o - mx
        lse = jnp.log(jnp.sum(jnp.exp(z), axis=1, keepdims=True))
        o_ref[...] = z - lse


# ---------------------------------------------------------------------------
# pallas_call wrappers
# ---------------------------------------------------------------------------
def _aggregate_layer1(a_i8, x, dinv, w1, b1, w2, *, tm, tk):
    n_pad = a_i8.shape[0]
    c_in, hidden = w1.shape
    c_out = w2.shape[1]
    grid = (n_pad // tm, n_pad // tk)
    return pl.pallas_call(
        gcn_layer1_kernel,
        out_shape=jax.ShapeDtypeStruct((n_pad, c_out), jnp.bfloat16),
        grid_spec=pltpu.PrefetchScalarGridSpec(
            num_scalar_prefetch=0,
            grid=grid,
            in_specs=[
                # A+I tile (int8). Default double-buffering; bump to
                # pipeline_mode=pl.Buffered(3) only if profiles show epilogue
                # bubbles in the HBM stream.
                pl.BlockSpec((tm, tk), lambda i, k: (i, k)),
                pl.BlockSpec((tk, c_in), lambda i, k: (k, 0)),      # X
                pl.BlockSpec((tm, 1), lambda i, k: (i, 0)),         # dinv rows
                pl.BlockSpec((tk, 1), lambda i, k: (k, 0)),         # dinv cols
                pl.BlockSpec((c_in, hidden), lambda i, k: (0, 0)),  # W1
                pl.BlockSpec((1, hidden), lambda i, k: (0, 0)),     # b1
                pl.BlockSpec((hidden, c_out), lambda i, k: (0, 0)),  # W2
            ],
            out_specs=pl.BlockSpec((tm, c_out), lambda i, k: (i, 0)),
            scratch_shapes=[pltpu.VMEM((tm, c_in), jnp.float32)],
        ),
        compiler_params=pltpu.CompilerParams(
            dimension_semantics=("parallel", "arbitrary")),
    )(a_i8, x, dinv, dinv, w1, b1, w2)


def _aggregate_layer2(a_i8, m, dinv, b2, *, tm, tk):
    n_pad = a_i8.shape[0]
    c_out = m.shape[1]
    grid = (n_pad // tm, n_pad // tk)
    return pl.pallas_call(
        gcn_layer2_kernel,
        out_shape=jax.ShapeDtypeStruct((n_pad, c_out), jnp.float32),
        grid_spec=pltpu.PrefetchScalarGridSpec(
            num_scalar_prefetch=0,
            grid=grid,
            in_specs=[
                pl.BlockSpec((tm, tk), lambda i, k: (i, k)),       # A + I (int8)
                pl.BlockSpec((tk, c_out), lambda i, k: (k, 0)),    # M (bf16, pre-scaled)
                pl.BlockSpec((tm, 1), lambda i, k: (i, 0)),        # dinv rows
                pl.BlockSpec((1, c_out), lambda i, k: (0, 0)),     # b2
            ],
            out_specs=pl.BlockSpec((tm, c_out), lambda i, k: (i, 0)),
            scratch_shapes=[pltpu.VMEM((tm, c_out), jnp.float32)],
        ),
        compiler_params=pltpu.CompilerParams(
            dimension_semantics=("parallel", "arbitrary")),
    )(a_i8, m, dinv, b2)


# ---------------------------------------------------------------------------
# Graph preprocessing + forward
# ---------------------------------------------------------------------------
def _round_up(x, m):
    return ((x + m - 1) // m) * m


def _pick_tile(n_pad, cap):
    """Largest multiple of 128 that divides n_pad and is <= cap."""
    t = min(cap, n_pad)
    t -= t % 128
    while n_pad % t:
        t -= 128
    return t


def build_adjacency_and_dinv(edge_index, num_nodes, n_pad):
    """Padded int8 (A + I) plus dinv = deg^-1/2 (column vector, f32).

    A[i, j] = 1 for each edge j -> i (duplicates collapse via `.set`), plus
    identity self-loops on the first `num_nodes` diagonal entries.  Padded
    rows/cols stay zero and get dinv = 0, so they contribute nothing.
    """
    src = edge_index[0]
    dst = edge_index[1]
    a = jnp.zeros((n_pad, n_pad), jnp.int8)
    a = a.at[dst, src].set(jnp.int8(1))
    diag = jnp.arange(num_nodes)
    a = a.at[diag, diag].add(jnp.int8(1))
    # Single int8 -> int32 row reduction (duplicate-edge-exact, unlike an
    # O(E) segment_sum over edge_index which would double-count duplicates).
    deg = jnp.sum(a, axis=1, dtype=jnp.int32).astype(jnp.float32)
    dinv = jnp.where(deg > 0, jax.lax.rsqrt(deg), 0.0)
    return a, dinv[:, None]


def student_gnn_forward(x, edge_index, params, *, tm=1024, tk=2048):
    w1, b1, w2, b2 = params
    n = x.shape[0]

    # Pad the node dimension only to the next multiple of 128 (not lcm(tm,tk));
    # clamp tiles to divisors of n_pad.  Prefer growing tk over tm so the
    # "parallel" row axis keeps >= 2 tiles for v7x's two TensorCores.
    n_pad = _round_up(n, 128)
    tm = _pick_tile(n_pad, tm)
    tk = _pick_tile(n_pad, tk)

    a_i8, dinv = build_adjacency_and_dinv(edge_index, n, n_pad)
    if n_pad != n:
        x = jnp.pad(x, ((0, n_pad - n), (0, 0)))

    m = _aggregate_layer1(a_i8, x, dinv, w1, b1, w2, tm=tm, tk=tk)
    out = _aggregate_layer2(a_i8, m, dinv, b2, tm=tm, tk=tk)
    return out[:n]


def init_params(key, in_channels, hidden_channels, out_channels):
    k1, k2 = jax.random.split(key)

    def glorot(k, fan_in, fan_out):
        lim = jnp.sqrt(6.0 / (fan_in + fan_out))
        return jax.random.uniform(k, (fan_in, fan_out), jnp.float32, -lim, lim)

    w1 = glorot(k1, in_channels, hidden_channels)
    b1 = jnp.zeros((1, hidden_channels), jnp.float32)
    w2 = glorot(k2, hidden_channels, out_channels)
    b2 = jnp.zeros((1, out_channels), jnp.float32)
    return (w1, b1, w2, b2)


def reference_forward(x, edge_index, params):
    """Pure-JAX f32 reference for correctness check."""
    n = x.shape[0]
    a = jnp.zeros((n, n), jnp.float32).at[edge_index[1], edge_index[0]].set(1.0)
    a = a + jnp.eye(n, dtype=jnp.float32)
    deg = jnp.sum(a, axis=1)
    dinv = jnp.where(deg > 0, 1.0 / jnp.sqrt(deg), 0.0)[:, None]
    a_hat = dinv * a * dinv.T
    w1, b1, w2, b2 = params
    h = jnp.maximum(a_hat @ (x @ w1) + b1, 0.0)
    o = a_hat @ (h @ w2) + b2
    return jax.nn.log_softmax(o, axis=1)


if __name__ == "__main__":
    key = jax.random.PRNGKey(0)
    k_x, k_e, k_p = jax.random.split(key, 3)

    num_nodes = 16
    in_channels, hidden_channels, out_channels = 8, 32, 4
    num_edges = 40

    x = jax.random.normal(k_x, (num_nodes, in_channels), jnp.float32)
    edge_index = jax.random.randint(k_e, (2, num_edges), 0, num_nodes, jnp.int32)
    params = init_params(k_p, in_channels, hidden_channels, out_channels)

    fwd = jax.jit(lambda xx, ee, pp: student_gnn_forward(xx, ee, pp))
    out = fwd(x, edge_index, params)
    out = jax.block_until_ready(out)

    ref = reference_forward(x, edge_index, params)
    assert out.shape == (num_nodes, out_channels)
    assert bool(jnp.all(jnp.isfinite(out)))
    # int8 adjacency is exact; the only precision loss is the bf16 cast of the
    # MXU operands (dinv*X and the stored M slab), bounded well below this
    # tolerance thanks to f32 accumulation.
    assert jnp.allclose(out, ref, atol=3e-2, rtol=3e-2)

    print("KERNEL_OK")
</pallas_src>

<mosaic_0001>
module attributes {stable_mosaic.version = 11 : i64} {
  func.func @gcn_layer1_kernel(%arg0: i32, %arg1: i32, %arg2: memref<128x128xi8, #tpu.memory_space<vmem>>, %arg3: memref<128x8xf32, #tpu.memory_space<vmem>>, %arg4: memref<128x1xf32, #tpu.memory_space<vmem>>, %arg5: memref<128x1xf32, #tpu.memory_space<vmem>>, %arg6: memref<8x32xf32, #tpu.memory_space<vmem>>, %arg7: memref<1x32xf32, #tpu.memory_space<vmem>>, %arg8: memref<32x4xf32, #tpu.memory_space<vmem>>, %arg9: memref<128x4xbf16, #tpu.memory_space<vmem>>, %arg10: memref<128x8xf32, #tpu.memory_space<vmem>>) attributes {dimension_semantics = [#tpu.dimension_semantics<parallel>, #tpu.dimension_semantics<arbitrary>], iteration_bounds = array<i64: 1, 1>, scalar_prefetch = 0 : i64, scratch_operands = 1 : i64, tpu.core_type = #tpu.core_type<tc>, window_params = [{transform_indices = @transform_0, window_bounds = array<i64: 128, 128>}, {transform_indices = @transform_1, window_bounds = array<i64: 128, 8>}, {transform_indices = @transform_2, window_bounds = array<i64: 128, 1>}, {transform_indices = @transform_3, window_bounds = array<i64: 128, 1>}, {pipeline_mode = #tpu.pipeline_mode<synchronous>, transform_indices = @transform_4, window_bounds = array<i64: 8, 32>}, {pipeline_mode = #tpu.pipeline_mode<synchronous>, transform_indices = @transform_5, window_bounds = array<i64: 1, 32>}, {pipeline_mode = #tpu.pipeline_mode<synchronous>, transform_indices = @transform_6, window_bounds = array<i64: 32, 4>}, {transform_indices = @transform_7, window_bounds = array<i64: 128, 4>}]} {
    %c0_i32 = arith.constant 0 : i32
    %0 = arith.cmpi eq, %arg1, %c0_i32 : i32
    %1 = arith.extui %0 : i1 to i32
    %c0_i32_0 = arith.constant 0 : i32
    %2 = arith.cmpi ne, %1, %c0_i32_0 : i32
    scf.if %2 {
      %cst_12 = arith.constant 0.000000e+00 : f32
      %17 = vector.broadcast %cst_12 : f32 to vector<128x8xf32>
      %c0_13 = arith.constant 0 : index
      %c0_14 = arith.constant 0 : index
      %18 = vector.load %arg10[%c0_13, %c0_14] : memref<128x8xf32, #tpu.memory_space<vmem>>, vector<128x8xf32>
      tpu.vector_store %arg10[%c0_13, %c0_14], %17 {strides = array<i32>} : memref<128x8xf32, #tpu.memory_space<vmem>>, vector<128x8xf32>,
    } else {
    }
    %c0 = arith.constant 0 : index
    %c0_1 = arith.constant 0 : index
    %3 = vector.load %arg5[%c0, %c0_1] : memref<128x1xf32, #tpu.memory_space<vmem>>, vector<128x1xf32>
    %c0_2 = arith.constant 0 : index
    %c0_3 = arith.constant 0 : index
    %4 = vector.load %arg3[%c0_2, %c0_3] : memref<128x8xf32, #tpu.memory_space<vmem>>, vector<128x8xf32>
    %5 = vector.broadcast %3 : vector<128x1xf32> to vector<128x8xf32>
    %6 = arith.mulf %5, %4 : vector<128x8xf32>
    %7 = arith.truncf %6 : vector<128x8xf32> to vector<128x8xbf16>
    %c0_4 = arith.constant 0 : index
    %c0_5 = arith.constant 0 : index
    %8 = vector.load %arg2[%c0_4, %c0_5] : memref<128x128xi8, #tpu.memory_space<vmem>>, vector<128x128xi8>
    %9 = arith.sitofp %8 : vector<128x128xi8> to vector<128x128xbf16>
    %c0_6 = arith.constant 0 : index
    %c0_7 = arith.constant 0 : index
    %10 = vector.load %arg10[%c0_6, %c0_7] : memref<128x8xf32, #tpu.memory_space<vmem>>, vector<128x8xf32>
    %cst = arith.constant dense<0.000000e+00> : vector<128x8xf32>
    %11 = tpu.matmul %9, %7, %cst {dimension_numbers = #tpu.dot_dimension_numbers<[1], [0], [0], [1], [0, 0, 1, 1], [], []>} : vector<128x128xbf16>, vector<128x8xbf16>, vector<128x8xf32> -> vector<128x8xf32>
    %12 = arith.addf %10, %11 : vector<128x8xf32>
    %c0_8 = arith.constant 0 : index
    %c0_9 = arith.constant 0 : index
    %13 = vector.load %arg10[%c0_8, %c0_9] : memref<128x8xf32, #tpu.memory_space<vmem>>, vector<128x8xf32>
    tpu.vector_store %arg10[%c0_8, %c0_9], %12 {strides = array<i32>} : memref<128x8xf32, #tpu.memory_space<vmem>>, vector<128x8xf32>,
    %c0_i32_10 = arith.constant 0 : i32
    %14 = arith.cmpi eq, %arg1, %c0_i32_10 : i32
    %15 = arith.extui %14 : i1 to i32
    %c0_i32_11 = arith.constant 0 : i32
    %16 = arith.cmpi ne, %15, %c0_i32_11 : i32
    scf.if %16 {
      %c0_12 = arith.constant 0 : index
      %c0_13 = arith.constant 0 : index
      %17 = vector.load %arg4[%c0_12, %c0_13] : memref<128x1xf32, #tpu.memory_space<vmem>>, vector<128x1xf32>
      %c0_14 = arith.constant 0 : index
      %c0_15 = arith.constant 0 : index
      %18 = vector.load %arg10[%c0_14, %c0_15] : memref<128x8xf32, #tpu.memory_space<vmem>>, vector<128x8xf32>
      %19 = vector.broadcast %17 : vector<128x1xf32> to vector<128x8xf32>
      %20 = arith.mulf %19, %18 : vector<128x8xf32>
      %c0_16 = arith.constant 0 : index
      %c0_17 = arith.constant 0 : index
      %21 = vector.load %arg6[%c0_16, %c0_17] : memref<8x32xf32, #tpu.memory_space<vmem>>, vector<8x32xf32>
      %cst_18 = arith.constant dense<0.000000e+00> : vector<128x32xf32>
      %22 = tpu.matmul %20, %21, %cst_18 {dimension_numbers = #tpu.dot_dimension_numbers<[1], [0], [0], [1], [0, 0, 1, 1], [], []>} : vector<128x8xf32>, vector<8x32xf32>, vector<128x32xf32> -> vector<128x32xf32>
      %c0_19 = arith.constant 0 : index
      %c0_20 = arith.constant 0 : index
      %23 = vector.load %arg7[%c0_19, %c0_20] : memref<1x32xf32, #tpu.memory_space<vmem>>, vector<1x32xf32>
      %24 = vector.broadcast %23 : vector<1x32xf32> to vector<128x32xf32>
      %25 = arith.addf %22, %24 : vector<128x32xf32>
      %cst_21 = arith.constant 0.000000e+00 : f32
      %26 = vector.broadcast %cst_21 : f32 to vector<128x32xf32>
      %27 = arith.maximumf %25, %26 : vector<128x32xf32>
      %c0_22 = arith.constant 0 : index
      %c0_23 = arith.constant 0 : index
      %28 = vector.load %arg8[%c0_22, %c0_23] : memref<32x4xf32, #tpu.memory_space<vmem>>, vector<32x4xf32>
      %cst_24 = arith.constant dense<0.000000e+00> : vector<128x4xf32>
      %29 = tpu.matmul %27, %28, %cst_24 {dimension_numbers = #tpu.dot_dimension_numbers<[1], [0], [0], [1], [0, 0, 1, 1], [], []>} : vector<128x32xf32>, vector<32x4xf32>, vector<128x4xf32> -> vector<128x4xf32>
      %c0_25 = arith.constant 0 : index
      %c0_26 = arith.constant 0 : index
      %30 = vector.load %arg4[%c0_25, %c0_26] : memref<128x1xf32, #tpu.memory_space<vmem>>, vector<128x1xf32>
      %31 = vector.broadcast %30 : vector<128x1xf32> to vector<128x4xf32>
      %32 = arith.mulf %31, %29 : vector<128x4xf32>
      %33 = arith.truncf %32 : vector<128x4xf32> to vector<128x4xbf16>
      %c0_27 = arith.constant 0 : index
      %c0_28 = arith.constant 0 : index
      %34 = vector.load %arg9[%c0_27, %c0_28] : memref<128x4xbf16, #tpu.memory_space<vmem>>, vector<128x4xbf16>
      tpu.vector_store %arg9[%c0_27, %c0_28], %33 {strides = array<i32>} : memref<128x4xbf16, #tpu.memory_space<vmem>>, vector<128x4xbf16>,
    } else {
    }
    return
  }
  func.func @transform_0(%arg0: i32, %arg1: i32) -> (i32, i32) {
    %c0_i32 = arith.constant 0 : i32
    return %arg0, %arg1 : i32, i32
  }
  func.func @transform_1(%arg0: i32, %arg1: i32) -> (i32, i32) {
    %c0_i32 = arith.constant 0 : i32
    %c0_i32_0 = arith.constant 0 : i32
    return %arg1, %c0_i32 : i32, i32
  }
  func.func @transform_2(%arg0: i32, %arg1: i32) -> (i32, i32) {
    %c0_i32 = arith.constant 0 : i32
    %c0_i32_0 = arith.constant 0 : i32
    return %arg0, %c0_i32 : i32, i32
  }
  func.func @transform_3(%arg0: i32, %arg1: i32) -> (i32, i32) {
    %c0_i32 = arith.constant 0 : i32
    %c0_i32_0 = arith.constant 0 : i32
    return %arg1, %c0_i32 : i32, i32
  }
  func.func @transform_4(%arg0: i32, %arg1: i32) -> (i32, i32) {
    %c0_i32 = arith.constant 0 : i32
    %c0_i32_0 = arith.constant 0 : i32
    %c0_i32_1 = arith.constant 0 : i32
    return %c0_i32, %c0_i32_0 : i32, i32
  }
  func.func @transform_5(%arg0: i32, %arg1: i32) -> (i32, i32) {
    %c0_i32 = arith.constant 0 : i32
    %c0_i32_0 = arith.constant 0 : i32
    %c0_i32_1 = arith.constant 0 : i32
    return %c0_i32, %c0_i32_0 : i32, i32
  }
  func.func @transform_6(%arg0: i32, %arg1: i32) -> (i32, i32) {
    %c0_i32 = arith.constant 0 : i32
    %c0_i32_0 = arith.constant 0 : i32
    %c0_i32_1 = arith.constant 0 : i32
    return %c0_i32, %c0_i32_0 : i32, i32
  }
  func.func @transform_7(%arg0: i32, %arg1: i32) -> (i32, i32) {
    %c0_i32 = arith.constant 0 : i32
    %c0_i32_0 = arith.constant 0 : i32
    return %arg0, %c0_i32 : i32, i32
  }
}

module attributes {stable_mosaic.version = 11 : i64} {
  func.func @gcn_layer2_kernel(%arg0: i32, %arg1: i32, %arg2: memref<128x128xi8, #tpu.memory_space<vmem>>, %arg3: memref<128x4xbf16, #tpu.memory_space<vmem>>, %arg4: memref<128x1xf32, #tpu.memory_space<vmem>>, %arg5: memref<1x4xf32, #tpu.memory_space<vmem>>, %arg6: memref<128x4xf32, #tpu.memory_space<vmem>>, %arg7: memref<128x4xf32, #tpu.memory_space<vmem>>) attributes {dimension_semantics = [#tpu.dimension_semantics<parallel>, #tpu.dimension_semantics<arbitrary>], iteration_bounds = array<i64: 1, 1>, scalar_prefetch = 0 : i64, scratch_operands = 1 : i64, tpu.core_type = #tpu.core_type<tc>, window_params = [{transform_indices = @transform_0, window_bounds = array<i64: 128, 128>}, {transform_indices = @transform_1, window_bounds = array<i64: 128, 4>}, {transform_indices = @transform_2, window_bounds = array<i64: 128, 1>}, {pipeline_mode = #tpu.pipeline_mode<synchronous>, transform_indices = @transform_3, window_bounds = array<i64: 1, 4>}, {transform_indices = @transform_4, window_bounds = array<i64: 128, 4>}]} {
    %c0_i32 = arith.constant 0 : i32
    %0 = arith.cmpi eq, %arg1, %c0_i32 : i32
    %1 = arith.extui %0 : i1 to i32
    %c0_i32_0 = arith.constant 0 : i32
    %2 = arith.cmpi ne, %1, %c0_i32_0 : i32
    scf.if %2 {
      %cst_10 = arith.constant 0.000000e+00 : f32
      %13 = vector.broadcast %cst_10 : f32 to vector<128x4xf32>
      %c0_11 = arith.constant 0 : index
      %c0_12 = arith.constant 0 : index
      %14 = vector.load %arg7[%c0_11, %c0_12] : memref<128x4xf32, #tpu.memory_space<vmem>>, vector<128x4xf32>
      tpu.vector_store %arg7[%c0_11, %c0_12], %13 {strides = array<i32>} : memref<128x4xf32, #tpu.memory_space<vmem>>, vector<128x4xf32>,
    } else {
    }
    %c0 = arith.constant 0 : index
    %c0_1 = arith.constant 0 : index
    %3 = vector.load %arg2[%c0, %c0_1] : memref<128x128xi8, #tpu.memory_space<vmem>>, vector<128x128xi8>
    %4 = arith.sitofp %3 : vector<128x128xi8> to vector<128x128xbf16>
    %c0_2 = arith.constant 0 : index
    %c0_3 = arith.constant 0 : index
    %5 = vector.load %arg7[%c0_2, %c0_3] : memref<128x4xf32, #tpu.memory_space<vmem>>, vector<128x4xf32>
    %c0_4 = arith.constant 0 : index
    %c0_5 = arith.constant 0 : index
    %6 = vector.load %arg3[%c0_4, %c0_5] : memref<128x4xbf16, #tpu.memory_space<vmem>>, vector<128x4xbf16>
    %cst = arith.constant dense<0.000000e+00> : vector<128x4xf32>
    %7 = tpu.matmul %4, %6, %cst {dimension_numbers = #tpu.dot_dimension_numbers<[1], [0], [0], [1], [0, 0, 1, 1], [], []>} : vector<128x128xbf16>, vector<128x4xbf16>, vector<128x4xf32> -> vector<128x4xf32>
    %8 = arith.addf %5, %7 : vector<128x4xf32>
    %c0_6 = arith.constant 0 : index
    %c0_7 = arith.constant 0 : index
    %9 = vector.load %arg7[%c0_6, %c0_7] : memref<128x4xf32, #tpu.memory_space<vmem>>, vector<128x4xf32>
    tpu.vector_store %arg7[%c0_6, %c0_7], %8 {strides = array<i32>} : memref<128x4xf32, #tpu.memory_space<vmem>>, vector<128x4xf32>,
    %c0_i32_8 = arith.constant 0 : i32
    %10 = arith.cmpi eq, %arg1, %c0_i32_8 : i32
    %11 = arith.extui %10 : i1 to i32
    %c0_i32_9 = arith.constant 0 : i32
    %12 = arith.cmpi ne, %11, %c0_i32_9 : i32
    scf.if %12 {
      %c0_10 = arith.constant 0 : index
      %c0_11 = arith.constant 0 : index
      %13 = vector.load %arg4[%c0_10, %c0_11] : memref<128x1xf32, #tpu.memory_space<vmem>>, vector<128x1xf32>
      %c0_12 = arith.constant 0 : index
      %c0_13 = arith.constant 0 : index
      %14 = vector.load %arg7[%c0_12, %c0_13] : memref<128x4xf32, #tpu.memory_space<vmem>>, vector<128x4xf32>
      %15 = vector.broadcast %13 : vector<128x1xf32> to vector<128x4xf32>
      %16 = arith.mulf %15, %14 : vector<128x4xf32>
      %c0_14 = arith.constant 0 : index
      %c0_15 = arith.constant 0 : index
      %17 = vector.load %arg5[%c0_14, %c0_15] : memref<1x4xf32, #tpu.memory_space<vmem>>, vector<1x4xf32>
      %18 = vector.broadcast %17 : vector<1x4xf32> to vector<128x4xf32>
      %19 = arith.addf %16, %18 : vector<128x4xf32>
      %cst_16 = arith.constant dense<0xFF800000> : vector<128xf32>
      %20 = vector.multi_reduction <maximumf>, %19, %cst_16 [1] : vector<128x4xf32> to vector<128xf32>
      %21 = vector.shape_cast %20 : vector<128xf32> to vector<128x1xf32>
      %22 = vector.broadcast %21 : vector<128x1xf32> to vector<128x4xf32>
      %23 = arith.subf %19, %22 : vector<128x4xf32>
      %24 = math.exp %23 : vector<128x4xf32>
      %cst_17 = arith.constant dense<0.000000e+00> : vector<128xf32>
      %25 = vector.multi_reduction <add>, %24, %cst_17 [1] : vector<128x4xf32> to vector<128xf32>
      %26 = vector.shape_cast %25 : vector<128xf32> to vector<128x1xf32>
      %27 = math.log %26 : vector<128x1xf32>
      %28 = vector.broadcast %27 : vector<128x1xf32> to vector<128x4xf32>
      %29 = arith.subf %23, %28 : vector<128x4xf32>
      %c0_18 = arith.constant 0 : index
      %c0_19 = arith.constant 0 : index
      %30 = vector.load %arg6[%c0_18, %c0_19] : memref<128x4xf32, #tpu.memory_space<vmem>>, vector<128x4xf32>
      tpu.vector_store %arg6[%c0_18, %c0_19], %29 {strides = array<i32>} : memref<128x4xf32, #tpu.memory_space<vmem>>, vector<128x4xf32>,
    } else {
    }
    return
  }
  func.func @transform_0(%arg0: i32, %arg1: i32) -> (i32, i32) {
    %c0_i32 = arith.constant 0 : i32
    return %arg0, %arg1 : i32, i32
  }
  func.func @transform_1(%arg0: i32, %arg1: i32) -> (i32, i32) {
    %c0_i32 = arith.constant 0 : i32
    %c0_i32_0 = arith.constant 0 : i32
    return %arg1, %c0_i32 : i32, i32
  }
  func.func @transform_2(%arg0: i32, %arg1: i32) -> (i32, i32) {
    %c0_i32 = arith.constant 0 : i32
    %c0_i32_0 = arith.constant 0 : i32
    return %arg0, %c0_i32 : i32, i32
  }
  func.func @transform_3(%arg0: i32, %arg1: i32) -> (i32, i32) {
    %c0_i32 = arith.constant 0 : i32
    %c0_i32_0 = arith.constant 0 : i32
    %c0_i32_1 = arith.constant 0 : i32
    return %c0_i32, %c0_i32_0 : i32, i32
  }
  func.func @transform_4(%arg0: i32, %arg1: i32) -> (i32, i32) {
    %c0_i32 = arith.constant 0 : i32
    %c0_i32_0 = arith.constant 0 : i32
    return %arg0, %c0_i32 : i32, i32
  }
}

</mosaic_0001>

<llo_original>
// kernel: _lambda_.2
$region0: #{_lambda_.2}
  #allocation0 [shape = 'u32[]', space=smem, size = 0x4, offset = 0x4, fixed_abs, tag = 'smem constant byte address 0x4 - core index']
  #allocation1 [shape = 'u32[144,128]{1,0:T(1,128)}', space=vmem, size = 0x12000, scoped, tag = 'internal scratch']
  #allocation2 [shape = 'f32[128,8]{1,0:T(8,128)}', space=vmem, size = 0x10000, scoped, tag = 'scratch operand']
  %s0 = inlined_call_operand.vmem [shape: s8[128,128], index: 0, kind: input, shape index: {}]
  %s1 = inlined_call_operand.vmem [shape: f32[128,8], index: 1, kind: input, shape index: {}]
  %s2 = inlined_call_operand.vmem [shape: f32[128,1], index: 2, kind: input, shape index: {}, may-alias: {2,3}]
  %s3 = inlined_call_operand.vmem [shape: f32[128,1], index: 3, kind: input, shape index: {}, may-alias: {2,3}]
  %s4 = inlined_call_operand.vmem [shape: f32[8,32], index: 4, kind: input, shape index: {}]
  %s5 = inlined_call_operand.vmem [shape: f32[1,32], index: 5, kind: input, shape index: {}]
  %s6 = inlined_call_operand.vmem [shape: f32[32,4], index: 6, kind: input, shape index: {}]
  %s7 = inlined_call_operand.vmem [shape: bf16[128,4], index: 7, kind: output, shape index: {}]
  %s8 = sld [smem:[#allocation0]]
  $region46: #{_lambda_.2} parent=0
    _
  %s10 = ssub.s32 1, %s8
  %s11 = scalar_select 0, %s10, %s8
  // Predicated region
  $region2: #{_lambda_.2} parent=0 // pred_check
    _
  $region3: #{_lambda_.2} parent=0 // pred_check_branch
    %13 = sbr.rel (0) target = $region5
  $region4: #{_lambda_.2} parent=0 // pred_region
    _
  $region5: #{_lambda_.2} parent=0 // pred_fallthru
    _
  // Predicated region
  $region6: #{_lambda_.2} parent=0 // pred_check
    _
  $region7: #{_lambda_.2} parent=0 // pred_check_branch
    %15 = sbr.rel (0) target = $region9
  $region8: #{_lambda_.2} parent=0 // pred_region
    _
  $region9: #{_lambda_.2} parent=0 // pred_fallthru
    _
  // Predicated region
  $region10: #{_lambda_.2} parent=0 // pred_check
    _
  $region11: #{_lambda_.2} parent=0 // pred_check_branch
    %17 = sbr.rel (0) target = $region13
  $region12: #{_lambda_.2} parent=0 // pred_region
    _
  $region13: #{_lambda_.2} parent=0 // pred_fallthru
    _
  // Predicated region
  $region14: #{_lambda_.2} parent=0 // pred_check
    _
  $region15: #{_lambda_.2} parent=0 // pred_check_branch
    %19 = sbr.rel (0) target = $region17
  $region16: #{_lambda_.2} parent=0 // pred_region
    _
  $region17: #{_lambda_.2} parent=0 // pred_fallthru
    _
  // Predicated region
  $region18: #{_lambda_.2} parent=0 // pred_check
    _
  $region19: #{_lambda_.2} parent=0 // pred_check_branch
    %21 = sbr.rel (0) target = $region21
  $region20: #{_lambda_.2} parent=0 // pred_region
    _
  $region21: #{_lambda_.2} parent=0 // pred_fallthru
    _
  // Predicated region
  $region22: #{_lambda_.2} parent=0 // pred_check
    _
  $region23: #{_lambda_.2} parent=0 // pred_check_branch
    %23 = sbr.rel (0) target = $region25
  $region24: #{_lambda_.2} parent=0 // pred_region
    _
  $region25: #{_lambda_.2} parent=0 // pred_fallthru
    _
  // Predicated region
  $region26: #{_lambda_.2} parent=0 // pred_check
    _
  $region27: #{_lambda_.2} parent=0 // pred_check_branch
    %25 = sbr.rel (0) target = $region29
  $region28: #{_lambda_.2} parent=0 // pred_region
    _
  $region29: #{_lambda_.2} parent=0 // pred_fallthru
    _
  %p27 = scmp.eq.s32.totalorder 0, 0
  // Predicated region
  $region30: #{_lambda_.2} parent=0 // pred_check
    %p28 = pneg %p27
  $region31: #{_lambda_.2} parent=0 // pred_check_branch
    %30 = sbr.rel (%p28) target = $region33
  $region32: #{_lambda_.2} parent=0 // pred_region
    %vm31 = vcmask 64512
    %32 = vst.msk [vmem:[#allocation2] sm:$0xff] %vm31, 0.0
    %33 = vst.msk [vmem:[#allocation2 + $0x8] sm:$0xff] %vm31, 0.0
    %34 = vst.msk [vmem:[#allocation2 + $0x10] sm:$0xff] %vm31, 0.0
    %35 = vst.msk [vmem:[#allocation2 + $0x18] sm:$0xff] %vm31, 0.0
    %36 = vst.msk [vmem:[#allocation2 + $0x20] sm:$0xff] %vm31, 0.0
    %37 = vst.msk [vmem:[#allocation2 + $0x28] sm:$0xff] %vm31, 0.0
    %38 = vst.msk [vmem:[#allocation2 + $0x30] sm:$0xff] %vm31, 0.0
    %39 = vst.msk [vmem:[#allocation2 + $0x38] sm:$0xff] %vm31, 0.0
    %40 = vst.msk [vmem:[#allocation2 + $0x40] sm:$0xff] %vm31, 0.0
    %41 = vst.msk [vmem:[#allocation2 + $0x48] sm:$0xff] %vm31, 0.0
    %42 = vst.msk [vmem:[#allocation2 + $0x50] sm:$0xff] %vm31, 0.0
    %43 = vst.msk [vmem:[#allocation2 + $0x58] sm:$0xff] %vm31, 0.0
    %44 = vst.msk [vmem:[#allocation2 + $0x60] sm:$0xff] %vm31, 0.0
    %45 = vst.msk [vmem:[#allocation2 + $0x68] sm:$0xff] %vm31, 0.0
    %46 = vst.msk [vmem:[#allocation2 + $0x70] sm:$0xff] %vm31, 0.0
    %47 = vst.msk [vmem:[#allocation2 + $0x78] sm:$0xff] %vm31, 0.0
  $region33: #{_lambda_.2} parent=0 // pred_fallthru
    _
  %v48 = vld [vmem:[%s3] sm:$0xff]
  %v49 = vld [vmem:[%s3 + $0x8] sm:$0xff]
  %v50 = vld [vmem:[%s3 + $0x10] sm:$0xff]
  %v51 = vld [vmem:[%s3 + $0x18] sm:$0xff]
  %v52 = vld [vmem:[%s3 + $0x20] sm:$0xff]
  %v53 = vld [vmem:[%s3 + $0x28] sm:$0xff]
  %v54 = vld [vmem:[%s3 + $0x30] sm:$0xff]
  %v55 = vld [vmem:[%s3 + $0x38] sm:$0xff]
  %v56 = vld [vmem:[%s3 + $0x40] sm:$0xff]
  %v57 = vld [vmem:[%s3 + $0x48] sm:$0xff]
  %v58 = vld [vmem:[%s3 + $0x50] sm:$0xff]
  %v59 = vld [vmem:[%s3 + $0x58] sm:$0xff]
  %v60 = vld [vmem:[%s3 + $0x60] sm:$0xff]
  %v61 = vld [vmem:[%s3 + $0x68] sm:$0xff]
  %v62 = vld [vmem:[%s3 + $0x70] sm:$0xff]
  %v63 = vld [vmem:[%s3 + $0x78] sm:$0xff]
  %v64 = vld [vmem:[%s1] sm:$0xff]
  %v65 = vld [vmem:[%s1 + $0x8] sm:$0xff]
  %v66 = vld [vmem:[%s1 + $0x10] sm:$0xff]
  %v67 = vld [vmem:[%s1 + $0x18] sm:$0xff]
  %v68 = vld [vmem:[%s1 + $0x20] sm:$0xff]
  %v69 = vld [vmem:[%s1 + $0x28] sm:$0xff]
  %v70 = vld [vmem:[%s1 + $0x30] sm:$0xff]
  %v71 = vld [vmem:[%s1 + $0x38] sm:$0xff]
  %v72 = vld [vmem:[%s1 + $0x40] sm:$0xff]
  %v73 = vld [vmem:[%s1 + $0x48] sm:$0xff]
  %v74 = vld [vmem:[%s1 + $0x50] sm:$0xff]
  %v75 = vld [vmem:[%s1 + $0x58] sm:$0xff]
  %v76 = vld [vmem:[%s1 + $0x60] sm:$0xff]
  %v77 = vld [vmem:[%s1 + $0x68] sm:$0xff]
  %v78 = vld [vmem:[%s1 + $0x70] sm:$0xff]
  %v79 = vld [vmem:[%s1 + $0x78] sm:$0xff]
  %81 = vset.pattern.permute.xlu0 0
  %82 = vperm.xlu0 %81, %v48
  %v83 = vpop.permute.xlu0 %82
  %86 = vset.pattern.permute.xlu0 0
  %87 = vperm.xlu0 %86, %v49
  %v88 = vpop.permute.xlu0 %87
  %91 = vset.pattern.permute.xlu0 0
  %92 = vperm.xlu0 %91, %v50
  %v93 = vpop.permute.xlu0 %92
  %96 = vset.pattern.permute.xlu0 0
  %97 = vperm.xlu0 %96, %v51
  %v98 = vpop.permute.xlu0 %97
  %101 = vset.pattern.permute.xlu0 0
  %102 = vperm.xlu0 %101, %v52
  %v103 = vpop.permute.xlu0 %102
  %106 = vset.pattern.permute.xlu0 0
  %107 = vperm.xlu0 %106, %v53
  %v108 = vpop.permute.xlu0 %107
  %111 = vset.pattern.permute.xlu0 0
  %112 = vperm.xlu0 %111, %v54
  %v113 = vpop.permute.xlu0 %112
  %116 = vset.pattern.permute.xlu0 0
  %117 = vperm.xlu0 %116, %v55
  %v118 = vpop.permute.xlu0 %117
  %121 = vset.pattern.permute.xlu0 0
  %122 = vperm.xlu0 %121, %v56
  %v123 = vpop.permute.xlu0 %122
  %126 = vset.pattern.permute.xlu0 0
  %127 = vperm.xlu0 %126, %v57
  %v128 = vpop.permute.xlu0 %127
  %131 = vset.pattern.permute.xlu0 0
  %132 = vperm.xlu0 %131, %v58
  %v133 = vpop.permute.xlu0 %132
  %136 = vset.pattern.permute.xlu0 0
  %137 = vperm.xlu0 %136, %v59
  %v138 = vpop.permute.xlu0 %137
  %141 = vset.pattern.permute.xlu0 0
  %142 = vperm.xlu0 %141, %v60
  %v143 = vpop.permute.xlu0 %142
  %146 = vset.pattern.permute.xlu0 0
  %147 = vperm.xlu0 %146, %v61
  %v148 = vpop.permute.xlu0 %147
  %151 = vset.pattern.permute.xlu0 0
  %152 = vperm.xlu0 %151, %v62
  %v153 = vpop.permute.xlu0 %152
  %156 = vset.pattern.permute.xlu0 0
  %157 = vperm.xlu0 %156, %v63
  %v158 = vpop.permute.xlu0 %157
  %v160 = vmul.f32 %v83, %v64
  %v161 = vmul.f32 %v88, %v65
  %v162 = vmul.f32 %v93, %v66
  %v163 = vmul.f32 %v98, %v67
  %v164 = vmul.f32 %v103, %v68
  %v165 = vmul.f32 %v108, %v69
  %v166 = vmul.f32 %v113, %v70
  %v167 = vmul.f32 %v118, %v71
  %v168 = vmul.f32 %v123, %v72
  %v169 = vmul.f32 %v128, %v73
  %v170 = vmul.f32 %v133, %v74
  %v171 = vmul.f32 %v138, %v75
  %v172 = vmul.f32 %v143, %v76
  %v173 = vmul.f32 %v148, %v77
  %v174 = vmul.f32 %v153, %v78
  %v175 = vmul.f32 %v158, %v79
  %v176 = vpack.c.bf16 %v161, %v160
  %v177 = vpack.c.bf16 %v163, %v162
  %v178 = vpack.c.bf16 %v165, %v164
  %v179 = vpack.c.bf16 %v167, %v166
  %v180 = vpack.c.bf16 %v169, %v168
  %v181 = vpack.c.bf16 %v171, %v170
  %v182 = vpack.c.bf16 %v173, %v172
  %v183 = vpack.c.bf16 %v175, %v174
  %v184 = vld [vmem:[%s0] sm:$0x3]
  %v185 = vld [vmem:[%s0 + $0x2] sm:$0x3]
  %v186 = vld [vmem:[%s0 + $0x4] sm:$0x3]
  %v187 = vld [vmem:[%s0 + $0x6] sm:$0x3]
  %v188 = vld [vmem:[%s0 + $0x8] sm:$0x3]
  %v189 = vld [vmem:[%s0 + $0xa] sm:$0x3]
  %v190 = vld [vmem:[%s0 + $0xc] sm:$0x3]
  %v191 = vld [vmem:[%s0 + $0xe] sm:$0x3]
  %v192 = vld [vmem:[%s0 + $0x10] sm:$0x3]
  %v193 = vld [vmem:[%s0 + $0x12] sm:$0x3]
  %v194 = vld [vmem:[%s0 + $0x14] sm:$0x3]
  %v195 = vld [vmem:[%s0 + $0x16] sm:$0x3]
  %v196 = vld [vmem:[%s0 + $0x18] sm:$0x3]
  %v197 = vld [vmem:[%s0 + $0x1a] sm:$0x3]
  %v198 = vld [vmem:[%s0 + $0x1c] sm:$0x3]
  %v199 = vld [vmem:[%s0 + $0x1e] sm:$0x3]
  %v200 = vunpack.c.l.s8.bf16 %v184
  %v201 = vunpack.c.l.s8.bf16 %v185
  %v202 = vunpack.c.l.s8.bf16 %v186
  %v203 = vunpack.c.l.s8.bf16 %v187
  %v204 = vunpack.c.l.s8.bf16 %v188
  %v205 = vunpack.c.l.s8.bf16 %v189
  %v206 = vunpack.c.l.s8.bf16 %v190
  %v207 = vunpack.c.l.s8.bf16 %v191
  %v208 = vunpack.c.l.s8.bf16 %v192
  %v209 = vunpack.c.l.s8.bf16 %v193
  %v210 = vunpack.c.l.s8.bf16 %v194
  %v211 = vunpack.c.l.s8.bf16 %v195
  %v212 = vunpack.c.l.s8.bf16 %v196
  %v213 = vunpack.c.l.s8.bf16 %v197
  %v214 = vunpack.c.l.s8.bf16 %v198
  %v215 = vunpack.c.l.s8.bf16 %v199
  %v216 = vld [vmem:[#allocation2] sm:$0xff]
  %v217 = vld [vmem:[#allocation2 + $0x8] sm:$0xff]
  %v218 = vld [vmem:[#allocation2 + $0x10] sm:$0xff]
  %v219 = vld [vmem:[#allocation2 + $0x18] sm:$0xff]
  %v220 = vld [vmem:[#allocation2 + $0x20] sm:$0xff]
  %v221 = vld [vmem:[#allocation2 + $0x28] sm:$0xff]
  %v222 = vld [vmem:[#allocation2 + $0x30] sm:$0xff]
  %v223 = vld [vmem:[#allocation2 + $0x38] sm:$0xff]
  %v224 = vld [vmem:[#allocation2 + $0x40] sm:$0xff]
  %v225 = vld [vmem:[#allocation2 + $0x48] sm:$0xff]
  %v226 = vld [vmem:[#allocation2 + $0x50] sm:$0xff]
  %v227 = vld [vmem:[#allocation2 + $0x58] sm:$0xff]
  %v228 = vld [vmem:[#allocation2 + $0x60] sm:$0xff]
  %v229 = vld [vmem:[#allocation2 + $0x68] sm:$0xff]
  %v230 = vld [vmem:[#allocation2 + $0x70] sm:$0xff]
  %v231 = vld [vmem:[#allocation2 + $0x78] sm:$0xff]
  %v248 = vunpack.c.l.b16 %v200
  %v249 = vunpack.c.l.b16 %v201
  %v250 = vunpack.c.l.b16 %v202
  %v251 = vunpack.c.l.b16 %v203
  %v252 = vunpack.c.l.b16 %v204
  %v253 = vunpack.c.l.b16 %v205
  %v254 = vunpack.c.l.b16 %v206
  %v255 = vunpack.c.l.b16 %v207
  %v256 = vunpack.c.l.b16 %v208
  %v257 = vunpack.c.l.b16 %v209
  %v258 = vunpack.c.l.b16 %v210
  %v259 = vunpack.c.l.b16 %v211
  %v260 = vunpack.c.l.b16 %v212
  %v261 = vunpack.c.l.b16 %v213
  %v262 = vunpack.c.l.b16 %v214
  %v263 = vunpack.c.l.b16 %v215
  %v264 = vpack.c.b16 %v249, %v248
  %v265 = vpack.c.b16 %v251, %v250
  %v266 = vpack.c.b16 %v253, %v252
  %v267 = vpack.c.b16 %v255, %v254
  %v268 = vpack.c.b16 %v257, %v256
  %v269 = vpack.c.b16 %v259, %v258
  %v270 = vpack.c.b16 %v261, %v260
  %v271 = vpack.c.b16 %v263, %v262
  %280 = vmatprep.subr.bf16.mxu0 0
  %281 = vmatpush1.bf16.msra.mxu0 %v176
  %282 = vmatprep.subr.bf16.mxu0 0
  %283 = vmatpush1.bf16.msra.mxu0 %v177
  %284 = vmatprep.subr.bf16.mxu0 0
  %285 = vmatpush1.bf16.msra.mxu0 %v178
  %286 = vmatprep.subr.bf16.mxu0 0
  %287 = vmatpush1.bf16.msra.mxu0 %v179
  %288 = vmatprep.subr.bf16.mxu0 0
  %289 = vmatpush1.bf16.msra.mxu0 %v180
  %290 = vmatprep.subr.bf16.mxu0 0
  %291 = vmatpush1.bf16.msra.mxu0 %v181
  %292 = vmatprep.subr.bf16.mxu0 0
  %293 = vmatpush1.bf16.msra.mxu0 %v182
  %294 = vmatprep.subr.bf16.mxu0 0
  %295 = vmatpush1.bf16.msra.mxu0 %v183
  %296 = vmatprep.subr.bf16.mxu0 0
  %297 = vmatpush1.bf16.msra.mxu0 0
  %298 = vmatprep.subr.bf16.mxu0 0
  %299 = vmatpush1.bf16.msra.mxu0 0
  %300 = vmatprep.subr.bf16.mxu0 0
  %301 = vmatpush1.bf16.msra.mxu0 0
  %302 = vmatprep.subr.bf16.mxu0 0
  %303 = vmatpush1.bf16.msra.mxu0 0
  %304 = vmatprep.subr.bf16.mxu0 0
  %305 = vmatpush1.bf16.msra.mxu0 0
  %306 = vmatprep.subr.bf16.mxu0 0
  %307 = vmatpush1.bf16.msra.mxu0 0
  %308 = vmatprep.subr.bf16.mxu0 0
  %309 = vmatpush1.bf16.msra.mxu0 0
  %310 = vmatprep.subr.bf16.mxu0 0
  %311 = vmatpush1.bf16.msra.mxu0 0
  %312 = vmatprep.mubr.bf16.mxu0 0
  %313 = vmatmul.mubr.bf16.gmra.mrb[0].mxu0 %v264
  %v314 = vpop.f32.mrb[0].mxu0
  %v315 = vadd.f32 0.0, %v314
  %v316 = vpop.f32.mrb[0].mxu0
  %v317 = vpop.f32.mrb[0].mxu0
  %v318 = vadd.f32 0.0, %v317
  %v319 = vpop.f32.mrb[0].mxu0
  %320 = vmatprep.mubr.bf16.mxu0 0
  %321 = vmatmul.mubr.bf16.gmra.mrb[0].mxu0 %v265
  %v322 = vpop.f32.mrb[0].mxu0
  %v323 = vadd.f32 0.0, %v322
  %v324 = vpop.f32.mrb[0].mxu0
  %v325 = vpop.f32.mrb[0].mxu0
  %v326 = vadd.f32 0.0, %v325
  %v327 = vpop.f32.mrb[0].mxu0
  %328 = vmatprep.mubr.bf16.mxu0 0
  %329 = vmatmul.mubr.bf16.gmra.mrb[0].mxu0 %v266
  %v330 = vpop.f32.mrb[0].mxu0
  %v331 = vadd.f32 0.0, %v330
  %v332 = vpop.f32.mrb[0].mxu0
  %v333 = vpop.f32.mrb[0].mxu0
  %v334 = vadd.f32 0.0, %v333
  %v335 = vpop.f32.mrb[0].mxu0
  %336 = vmatprep.mubr.bf16.mxu0 0
  %337 = vmatmul.mubr.bf16.gmra.mrb[0].mxu0 %v267
  %v338 = vpop.f32.mrb[0].mxu0
  %v339 = vadd.f32 0.0, %v338
  %v340 = vpop.f32.mrb[0].mxu0
  %v341 = vpop.f32.mrb[0].mxu0
  %v342 = vadd.f32 0.0, %v341
  %v343 = vpop.f32.mrb[0].mxu0
  %344 = vmatprep.mubr.bf16.mxu0 0
  %345 = vmatmul.mubr.bf16.gmra.mrb[0].mxu0 %v268
  %v346 = vpop.f32.mrb[0].mxu0
  %v347 = vadd.f32 0.0, %v346
  %v348 = vpop.f32.mrb[0].mxu0
  %v349 = vpop.f32.mrb[0].mxu0
  %v350 = vadd.f32 0.0, %v349
  %v351 = vpop.f32.mrb[0].mxu0
  %352 = vmatprep.mubr.bf16.mxu0 0
  %353 = vmatmul.mubr.bf16.gmra.mrb[0].mxu0 %v269
  %v354 = vpop.f32.mrb[0].mxu0
  %v355 = vadd.f32 0.0, %v354
  %v356 = vpop.f32.mrb[0].mxu0
  %v357 = vpop.f32.mrb[0].mxu0
  %v358 = vadd.f32 0.0, %v357
  %v359 = vpop.f32.mrb[0].mxu0
  %360 = vmatprep.mubr.bf16.mxu0 0
  %361 = vmatmul.mubr.bf16.gmra.mrb[0].mxu0 %v270
  %v362 = vpop.f32.mrb[0].mxu0
  %v363 = vadd.f32 0.0, %v362
  %v364 = vpop.f32.mrb[0].mxu0
  %v365 = vpop.f32.mrb[0].mxu0
  %v366 = vadd.f32 0.0, %v365
  %v367 = vpop.f32.mrb[0].mxu0
  %368 = vmatprep.mubr.bf16.mxu0 0
  %369 = vmatmul.mubr.bf16.gmra.mrb[0].mxu0 %v271
  %v370 = vpop.f32.mrb[0].mxu0
  %v371 = vadd.f32 0.0, %v370
  %v372 = vpop.f32.mrb[0].mxu0
  %v373 = vpop.f32.mrb[0].mxu0
  %v374 = vadd.f32 0.0, %v373
  %v375 = vpop.f32.mrb[0].mxu0
  %376 = vdwg.mxu0
  %v377 = vadd.f32 %v216, %v315
  %v378 = vadd.f32 %v217, %v318
  %v379 = vadd.f32 %v218, %v323
  %v380 = vadd.f32 %v219, %v326
  %v381 = vadd.f32 %v220, %v331
  %v382 = vadd.f32 %v221, %v334
  %v383 = vadd.f32 %v222, %v339
  %v384 = vadd.f32 %v223, %v342
  %v385 = vadd.f32 %v224, %v347
  %v386 = vadd.f32 %v225, %v350
  %v387 = vadd.f32 %v226, %v355
  %v388 = vadd.f32 %v227, %v358
  %v389 = vadd.f32 %v228, %v363
  %v390 = vadd.f32 %v229, %v366
  %v391 = vadd.f32 %v230, %v371
  %v392 = vadd.f32 %v231, %v374
  %vm393 = vcmask 64512
  %394 = vst.msk [vmem:[#allocation2] sm:$0xff] %vm393, %v377
  %395 = vst.msk [vmem:[#allocation2 + $0x8] sm:$0xff] %vm393, %v378
  %396 = vst.msk [vmem:[#allocation2 + $0x10] sm:$0xff] %vm393, %v379
  %397 = vst.msk [vmem:[#allocation2 + $0x18] sm:$0xff] %vm393, %v380
  %398 = vst.msk [vmem:[#allocation2 + $0x20] sm:$0xff] %vm393, %v381
  %399 = vst.msk [vmem:[#allocation2 + $0x28] sm:$0xff] %vm393, %v382
  %400 = vst.msk [vmem:[#allocation2 + $0x30] sm:$0xff] %vm393, %v383
  %401 = vst.msk [vmem:[#allocation2 + $0x38] sm:$0xff] %vm393, %v384
  %402 = vst.msk [vmem:[#allocation2 + $0x40] sm:$0xff] %vm393, %v385
  %403 = vst.msk [vmem:[#allocation2 + $0x48] sm:$0xff] %vm393, %v386
  %404 = vst.msk [vmem:[#allocation2 + $0x50] sm:$0xff] %vm393, %v387
  %405 = vst.msk [vmem:[#allocation2 + $0x58] sm:$0xff] %vm393, %v388
  %406 = vst.msk [vmem:[#allocation2 + $0x60] sm:$0xff] %vm393, %v389
  %407 = vst.msk [vmem:[#allocation2 + $0x68] sm:$0xff] %vm393, %v390
  %408 = vst.msk [vmem:[#allocation2 + $0x70] sm:$0xff] %vm393, %v391
  %409 = vst.msk [vmem:[#allocation2 + $0x78] sm:$0xff] %vm393, %v392
  // Predicated region
  $region34: #{_lambda_.2} parent=0 // pred_check
    %p410 = pneg %p27
  $region35: #{_lambda_.2} parent=0 // pred_check_branch
    %412 = sbr.rel (%p410) target = $region37
  $region36: #{_lambda_.2} parent=0 // pred_region
    %v413 = vld [vmem:[%s2] sm:$0xff]
    %v414 = vld [vmem:[%s2 + $0x8] sm:$0xff]
    %v415 = vld [vmem:[%s2 + $0x10] sm:$0xff]
    %v416 = vld [vmem:[%s2 + $0x18] sm:$0xff]
    %v417 = vld [vmem:[%s2 + $0x20] sm:$0xff]
    %v418 = vld [vmem:[%s2 + $0x28] sm:$0xff]
    %v419 = vld [vmem:[%s2 + $0x30] sm:$0xff]
    %v420 = vld [vmem:[%s2 + $0x38] sm:$0xff]
    %v421 = vld [vmem:[%s2 + $0x40] sm:$0xff]
    %v422 = vld [vmem:[%s2 + $0x48] sm:$0xff]
    %v423 = vld [vmem:[%s2 + $0x50] sm:$0xff]
    %v424 = vld [vmem:[%s2 + $0x58] sm:$0xff]
    %v425 = vld [vmem:[%s2 + $0x60] sm:$0xff]
    %v426 = vld [vmem:[%s2 + $0x68] sm:$0xff]
    %v427 = vld [vmem:[%s2 + $0x70] sm:$0xff]
    %v428 = vld [vmem:[%s2 + $0x78] sm:$0xff]
    %v429 = vld [vmem:[#allocation2] sm:$0xff]
    %v430 = vld [vmem:[#allocation2 + $0x8] sm:$0xff]
    %v431 = vld [vmem:[#allocation2 + $0x10] sm:$0xff]
    %v432 = vld [vmem:[#allocation2 + $0x18] sm:$0xff]
    %v433 = vld [vmem:[#allocation2 + $0x20] sm:$0xff]
    %v434 = vld [vmem:[#allocation2 + $0x28] sm:$0xff]
    %v435 = vld [vmem:[#allocation2 + $0x30] sm:$0xff]
    %v436 = vld [vmem:[#allocation2 + $0x38] sm:$0xff]
    %v437 = vld [vmem:[#allocation2 + $0x40] sm:$0xff]
    %v438 = vld [vmem:[#allocation2 + $0x48] sm:$0xff]
    %v439 = vld [vmem:[#allocation2 + $0x50] sm:$0xff]
    %v440 = vld [vmem:[#allocation2 + $0x58] sm:$0xff]
    %v441 = vld [vmem:[#allocation2 + $0x60] sm:$0xff]
    %v442 = vld [vmem:[#allocation2 + $0x68] sm:$0xff]
    %v443 = vld [vmem:[#allocation2 + $0x70] sm:$0xff]
    %v444 = vld [vmem:[#allocation2 + $0x78] sm:$0xff]
    %446 = vset.pattern.permute.xlu0 0
    %447 = vperm.xlu0 %446, %v413
    %v448 = vpop.permute.xlu0 %447
    %451 = vset.pattern.permute.xlu0 0
    %452 = vperm.xlu0 %451, %v414
    %v453 = vpop.permute.xlu0 %452
    %456 = vset.pattern.permute.xlu0 0
    %457 = vperm.xlu0 %456, %v415
    %v458 = vpop.permute.xlu0 %457
    %461 = vset.pattern.permute.xlu0 0
    %462 = vperm.xlu0 %461, %v416
    %v463 = vpop.permute.xlu0 %462
    %466 = vset.pattern.permute.xlu0 0
    %467 = vperm.xlu0 %466, %v417
    %v468 = vpop.permute.xlu0 %467
    %471 = vset.pattern.permute.xlu0 0
    %472 = vperm.xlu0 %471, %v418
    %v473 = vpop.permute.xlu0 %472
    %476 = vset.pattern.permute.xlu0 0
    %477 = vperm.xlu0 %476, %v419
    %v478 = vpop.permute.xlu0 %477
    %481 = vset.pattern.permute.xlu0 0
    %482 = vperm.xlu0 %481, %v420
    %v483 = vpop.permute.xlu0 %482
    %486 = vset.pattern.permute.xlu0 0
    %487 = vperm.xlu0 %486, %v421
    %v488 = vpop.permute.xlu0 %487
    %491 = vset.pattern.permute.xlu0 0
    %492 = vperm.xlu0 %491, %v422
    %v493 = vpop.permute.xlu0 %492
    %496 = vset.pattern.permute.xlu0 0
    %497 = vperm.xlu0 %496, %v423
    %v498 = vpop.permute.xlu0 %497
    %501 = vset.pattern.permute.xlu0 0
    %502 = vperm.xlu0 %501, %v424
    %v503 = vpop.permute.xlu0 %502
    %506 = vset.pattern.permute.xlu0 0
    %507 = vperm.xlu0 %506, %v425
    %v508 = vpop.permute.xlu0 %507
    %511 = vset.pattern.permute.xlu0 0
    %512 = vperm.xlu0 %511, %v426
    %v513 = vpop.permute.xlu0 %512
    %516 = vset.pattern.permute.xlu0 0
    %517 = vperm.xlu0 %516, %v427
    %v518 = vpop.permute.xlu0 %517
    %521 = vset.pattern.permute.xlu0 0
    %522 = vperm.xlu0 %521, %v428
    %v523 = vpop.permute.xlu0 %522
    %v525 = vmul.f32 %v448, %v429
    %v526 = vmul.f32 %v453, %v430
    %v527 = vmul.f32 %v458, %v431
    %v528 = vmul.f32 %v463, %v432
    %v529 = vmul.f32 %v468, %v433
    %v530 = vmul.f32 %v473, %v434
    %v531 = vmul.f32 %v478, %v435
    %v532 = vmul.f32 %v483, %v436
    %v533 = vmul.f32 %v488, %v437
    %v534 = vmul.f32 %v493, %v438
    %v535 = vmul.f32 %v498, %v439
    %v536 = vmul.f32 %v503, %v440
    %v537 = vmul.f32 %v508, %v441
    %v538 = vmul.f32 %v513, %v442
    %v539 = vmul.f32 %v518, %v443
    %v540 = vmul.f32 %v523, %v444
    %v541 = vld [vmem:[%s4] sm:$0xff]
    %v542 = vld [vmem:[%s5] sm:$0x1]
    %v544 = vlaneseq
    %v545 = vshrl.u32 %v544, 7
    %v546 = vsub.s32 0, %v545
    %v547 = vrot.slane %v542, %v546
    %v550 = vsel %vm393, %v525, 0
    %v553 = vsel %vm393, %v526, 0
    %v556 = vsel %vm393, %v527, 0
    %v559 = vsel %vm393, %v528, 0
    %v562 = vsel %vm393, %v529, 0
    %v565 = vsel %vm393, %v530, 0
    %v568 = vsel %vm393, %v531, 0
    %v571 = vsel %vm393, %v532, 0
    %v574 = vsel %vm393, %v533, 0
    %v577 = vsel %vm393, %v534, 0
    %v580 = vsel %vm393, %v535, 0
    %v583 = vsel %vm393, %v536, 0
    %v586 = vsel %vm393, %v537, 0
    %v589 = vsel %vm393, %v538, 0
    %v592 = vsel %vm393, %v539, 0
    %v595 = vsel %vm393, %v540, 0
    %597 = vmatprep.subr.mxu0 0.0
    %598 = vmatpush1.msra.mxu0 %v541
    %599 = vmatprep.subr.mxu0 0.0
    %600 = vmatpush1.msra.mxu0 0.0
    %601 = vmatprep.subr.mxu0 0.0
    %602 = vmatpush1.msra.mxu0 0.0
    %603 = vmatprep.subr.mxu0 0.0
    %604 = vmatpush1.msra.mxu0 0.0
    %605 = vmatprep.subr.mxu0 0.0
    %606 = vmatpush1.msra.mxu0 0.0
    %607 = vmatprep.subr.mxu0 0.0
    %608 = vmatpush1.msra.mxu0 0.0
    %609 = vmatprep.subr.mxu0 0.0
    %610 = vmatpush1.msra.mxu0 0.0
    %611 = vmatprep.subr.mxu0 0.0
    %612 = vmatpush1.msra.mxu0 0.0
    %613 = vmatprep.subr.mxu0 0.0
    %614 = vmatpush1.msra.mxu0 0.0
    %615 = vmatprep.subr.mxu0 0.0
    %616 = vmatpush1.msra.mxu0 0.0
    %617 = vmatprep.subr.mxu0 0.0
    %618 = vmatpush1.msra.mxu0 0.0
    %619 = vmatprep.subr.mxu0 0.0
    %620 = vmatpush1.msra.mxu0 0.0
    %621 = vmatprep.subr.mxu0 0.0
    %622 = vmatpush1.msra.mxu0 0.0
    %623 = vmatprep.subr.mxu0 0.0
    %624 = vmatpush1.msra.mxu0 0.0
    %625 = vmatprep.subr.mxu0 0.0
    %626 = vmatpush1.msra.mxu0 0.0
    %627 = vmatprep.subr.mxu0 0.0
    %628 = vmatpush1.msra.mxu0 0.0
    %629 = vmatprep.subr.mxu0 0.0
    %630 = vmatpush1.msra.mxu0 0.0
    %631 = vmatprep.subr.mxu0 0.0
    %632 = vmatpush1.msra.mxu0 0.0
    %633 = vmatprep.subr.mxu0 0.0
    %634 = vmatpush1.msra.mxu0 0.0
    %635 = vmatprep.subr.mxu0 0.0
    %636 = vmatpush1.msra.mxu0 0.0
    %637 = vmatprep.subr.mxu0 0.0
    %638 = vmatpush1.msra.mxu0 0.0
    %639 = vmatprep.subr.mxu0 0.0
    %640 = vmatpush1.msra.mxu0 0.0
    %641 = vmatprep.subr.mxu0 0.0
    %642 = vmatpush1.msra.mxu0 0.0
    %643 = vmatprep.subr.mxu0 0.0
    %644 = vmatpush1.msra.mxu0 0.0
    %645 = vmatprep.subr.mxu0 0.0
    %646 = vmatpush1.msra.mxu0 0.0
    %647 = vmatprep.subr.mxu0 0.0
    %648 = vmatpush1.msra.mxu0 0.0
    %649 = vmatprep.subr.mxu0 0.0
    %650 = vmatpush1.msra.mxu0 0.0
    %651 = vmatprep.subr.mxu0 0.0
    %652 = vmatpush1.msra.mxu0 0.0
    %653 = vmatprep.subr.mxu0 0.0
    %654 = vmatpush1.msra.mxu0 0.0
    %655 = vmatprep.subr.mxu0 0.0
    %656 = vmatpush1.msra.mxu0 0.0
    %657 = vmatprep.subr.mxu0 0.0
    %658 = vmatpush1.msra.mxu0 0.0
    %659 = vmatprep.subr.mxu0 0.0
    %660 = vmatpush1.msra.mxu0 0.0
    %661 = vmatprep.mubr.f32.mxu0 0.0
    %662 = vmatmul.mubr.f32.gmra.mrb[0].mxu0 %v550
    %v663 = vpop.f32.mrb[0].mxu0
    %v664 = vadd.f32 %v547, %v663
    %v665 = vpop.f32.mrb[0].mxu0
    %666 = vmatprep.mubr.f32.mxu0 0.0
    %667 = vmatmul.mubr.f32.gmra.mrb[0].mxu0 %v553
    %v668 = vpop.f32.mrb[0].mxu0
    %v669 = vadd.f32 %v547, %v668
    %v670 = vpop.f32.mrb[0].mxu0
    %671 = vmatprep.mubr.f32.mxu0 0.0
    %672 = vmatmul.mubr.f32.gmra.mrb[0].mxu0 %v556
    %v673 = vpop.f32.mrb[0].mxu0
    %v674 = vadd.f32 %v547, %v673
    %v675 = vpop.f32.mrb[0].mxu0
    %676 = vmatprep.mubr.f32.mxu0 0.0
    %677 = vmatmul.mubr.f32.gmra.mrb[0].mxu0 %v559
    %v678 = vpop.f32.mrb[0].mxu0
    %v679 = vadd.f32 %v547, %v678
    %v680 = vpop.f32.mrb[0].mxu0
    %681 = vmatprep.mubr.f32.mxu0 0.0
    %682 = vmatmul.mubr.f32.gmra.mrb[0].mxu0 %v562
    %v683 = vpop.f32.mrb[0].mxu0
    %v684 = vadd.f32 %v547, %v683
    %v685 = vpop.f32.mrb[0].mxu0
    %686 = vmatprep.mubr.f32.mxu0 0.0
    %687 = vmatmul.mubr.f32.gmra.mrb[0].mxu0 %v565
    %v688 = vpop.f32.mrb[0].mxu0
    %v689 = vadd.f32 %v547, %v688
    %v690 = vpop.f32.mrb[0].mxu0
    %691 = vmatprep.mubr.f32.mxu0 0.0
    %692 = vmatmul.mubr.f32.gmra.mrb[0].mxu0 %v568
    %v693 = vpop.f32.mrb[0].mxu0
    %v694 = vadd.f32 %v547, %v693
    %v695 = vpop.f32.mrb[0].mxu0
    %696 = vmatprep.mubr.f32.mxu0 0.0
    %697 = vmatmul.mubr.f32.gmra.mrb[0].mxu0 %v571
    %v698 = vpop.f32.mrb[0].mxu0
    %v699 = vadd.f32 %v547, %v698
    %v700 = vpop.f32.mrb[0].mxu0
    %701 = vmatprep.mubr.f32.mxu0 0.0
    %702 = vmatmul.mubr.f32.gmra.mrb[0].mxu0 %v574
    %v703 = vpop.f32.mrb[0].mxu0
    %v704 = vadd.f32 %v547, %v703
    %v705 = vpop.f32.mrb[0].mxu0
    %706 = vmatprep.mubr.f32.mxu0 0.0
    %707 = vmatmul.mubr.f32.gmra.mrb[0].mxu0 %v577
    %v708 = vpop.f32.mrb[0].mxu0
    %v709 = vadd.f32 %v547, %v708
    %v710 = vpop.f32.mrb[0].mxu0
    %711 = vmatprep.mubr.f32.mxu0 0.0
    %712 = vmatmul.mubr.f32.gmra.mrb[0].mxu0 %v580
    %v713 = vpop.f32.mrb[0].mxu0
    %v714 = vadd.f32 %v547, %v713
    %v715 = vpop.f32.mrb[0].mxu0
    %716 = vmatprep.mubr.f32.mxu0 0.0
    %717 = vmatmul.mubr.f32.gmra.mrb[0].mxu0 %v583
    %v718 = vpop.f32.mrb[0].mxu0
    %v719 = vadd.f32 %v547, %v718
    %v720 = vpop.f32.mrb[0].mxu0
    %721 = vmatprep.mubr.f32.mxu0 0.0
    %722 = vmatmul.mubr.f32.gmra.mrb[0].mxu0 %v586
    %v723 = vpop.f32.mrb[0].mxu0
    %v724 = vadd.f32 %v547, %v723
    %v725 = vpop.f32.mrb[0].mxu0
    %726 = vmatprep.mubr.f32.mxu0 0.0
    %727 = vmatmul.mubr.f32.gmra.mrb[0].mxu0 %v589
    %v728 = vpop.f32.mrb[0].mxu0
    %v729 = vadd.f32 %v547, %v728
    %v730 = vpop.f32.mrb[0].mxu0
    %731 = vmatprep.mubr.f32.mxu0 0.0
    %732 = vmatmul.mubr.f32.gmra.mrb[0].mxu0 %v592
    %v733 = vpop.f32.mrb[0].mxu0
    %v734 = vadd.f32 %v547, %v733
    %v735 = vpop.f32.mrb[0].mxu0
    %736 = vmatprep.mubr.f32.mxu0 0.0
    %737 = vmatmul.mubr.f32.gmra.mrb[0].mxu0 %v595
    %v738 = vpop.f32.mrb[0].mxu0
    %v739 = vadd.f32 %v547, %v738
    %v740 = vpop.f32.mrb[0].mxu0
    %741 = vdwg.mxu0
    %v742 = vmax.f32 %v664, 0.0
    %v743 = vmax.f32 %v669, 0.0
    %v744 = vmax.f32 %v674, 0.0
    %v745 = vmax.f32 %v679, 0.0
    %v746 = vmax.f32 %v684, 0.0
    %v747 = vmax.f32 %v689, 0.0
    %v748 = vmax.f32 %v694, 0.0
    %v749 = vmax.f32 %v699, 0.0
    %v750 = vmax.f32 %v704, 0.0
    %v751 = vmax.f32 %v709, 0.0
    %v752 = vmax.f32 %v714, 0.0
    %v753 = vmax.f32 %v719, 0.0
    %v754 = vmax.f32 %v724, 0.0
    %v755 = vmax.f32 %v729, 0.0
    %v756 = vmax.f32 %v734, 0.0
    %v757 = vmax.f32 %v739, 0.0
    %v758 = vld [vmem:[%s6] sm:$0xff]
    %v759 = vld [vmem:[%s6 + $0x8] sm:$0xff]
    %v760 = vld [vmem:[%s6 + $0x10] sm:$0xff]
    %v761 = vld [vmem:[%s6 + $0x18] sm:$0xff]
    %vm762 = vcmask 261120
    %v764 = vsel %vm762, %v742, 0
    %v767 = vsel %vm762, %v743, 0
    %v770 = vsel %vm762, %v744, 0
    %v773 = vsel %vm762, %v745, 0
    %v776 = vsel %vm762, %v746, 0
    %v779 = vsel %vm762, %v747, 0
    %v782 = vsel %vm762, %v748, 0
    %v785 = vsel %vm762, %v749, 0
    %v788 = vsel %vm762, %v750, 0
    %v791 = vsel %vm762, %v751, 0
    %v794 = vsel %vm762, %v752, 0
    %v797 = vsel %vm762, %v753, 0
    %v800 = vsel %vm762, %v754, 0
    %v803 = vsel %vm762, %v755, 0
    %v806 = vsel %vm762, %v756, 0
    %v809 = vsel %vm762, %v757, 0
    %811 = vmatprep.subr.mxu0 0.0
    %812 = vmatpush1.msra.mxu0 %v758
    %813 = vmatprep.subr.mxu0 0.0
    %814 = vmatpush1.msra.mxu0 %v759
    %815 = vmatprep.subr.mxu0 0.0
    %816 = vmatpush1.msra.mxu0 %v760
    %817 = vmatprep.subr.mxu0 0.0
    %818 = vmatpush1.msra.mxu0 %v761
    %819 = vmatprep.subr.mxu0 0.0
    %820 = vmatpush1.msra.mxu0 0.0
    %821 = vmatprep.subr.mxu0 0.0
    %822 = vmatpush1.msra.mxu0 0.0
    %823 = vmatprep.subr.mxu0 0.0
    %824 = vmatpush1.msra.mxu0 0.0
    %825 = vmatprep.subr.mxu0 0.0
    %826 = vmatpush1.msra.mxu0 0.0
    %827 = vmatprep.subr.mxu0 0.0
    %828 = vmatpush1.msra.mxu0 0.0
    %829 = vmatprep.subr.mxu0 0.0
    %830 = vmatpush1.msra.mxu0 0.0
    %831 = vmatprep.subr.mxu0 0.0
    %832 = vmatpush1.msra.mxu0 0.0
    %833 = vmatprep.subr.mxu0 0.0
    %834 = vmatpush1.msra.mxu0 0.0
    %835 = vmatprep.subr.mxu0 0.0
    %836 = vmatpush1.msra.mxu0 0.0
    %837 = vmatprep.subr.mxu0 0.0
    %838 = vmatpush1.msra.mxu0 0.0
    %839 = vmatprep.subr.mxu0 0.0
    %840 = vmatpush1.msra.mxu0 0.0
    %841 = vmatprep.subr.mxu0 0.0
    %842 = vmatpush1.msra.mxu0 0.0
    %843 = vmatprep.subr.mxu0 0.0
    %844 = vmatpush1.msra.mxu0 0.0
    %845 = vmatprep.subr.mxu0 0.0
    %846 = vmatpush1.msra.mxu0 0.0
    %847 = vmatprep.subr.mxu0 0.0
    %848 = vmatpush1.msra.mxu0 0.0
    %849 = vmatprep.subr.mxu0 0.0
    %850 = vmatpush1.msra.mxu0 0.0
    %851 = vmatprep.subr.mxu0 0.0
    %852 = vmatpush1.msra.mxu0 0.0
    %853 = vmatprep.subr.mxu0 0.0
    %854 = vmatpush1.msra.mxu0 0.0
    %855 = vmatprep.subr.mxu0 0.0
    %856 = vmatpush1.msra.mxu0 0.0
    %857 = vmatprep.subr.mxu0 0.0
    %858 = vmatpush1.msra.mxu0 0.0
    %859 = vmatprep.subr.mxu0 0.0
    %860 = vmatpush1.msra.mxu0 0.0
    %861 = vmatprep.subr.mxu0 0.0
    %862 = vmatpush1.msra.mxu0 0.0
    %863 = vmatprep.subr.mxu0 0.0
    %864 = vmatpush1.msra.mxu0 0.0
    %865 = vmatprep.subr.mxu0 0.0
    %866 = vmatpush1.msra.mxu0 0.0
    %867 = vmatprep.subr.mxu0 0.0
    %868 = vmatpush1.msra.mxu0 0.0
    %869 = vmatprep.subr.mxu0 0.0
    %870 = vmatpush1.msra.mxu0 0.0
    %871 = vmatprep.subr.mxu0 0.0
    %872 = vmatpush1.msra.mxu0 0.0
    %873 = vmatprep.subr.mxu0 0.0
    %874 = vmatpush1.msra.mxu0 0.0
    %875 = vmatprep.mubr.f32.mxu0 0.0
    %876 = vmatmul.mubr.f32.gmra.mrb[0].mxu0 %v764
    %v877 = vpop.f32.mrb[0].mxu0
    %v878 = vadd.f32 0.0, %v877
    %v879 = vpop.f32.mrb[0].mxu0
    %880 = vmatprep.mubr.f32.mxu0 0.0
    %881 = vmatmul.mubr.f32.gmra.mrb[0].mxu0 %v767
    %v882 = vpop.f32.mrb[0].mxu0
    %v883 = vadd.f32 0.0, %v882
    %v884 = vpop.f32.mrb[0].mxu0
    %885 = vmatprep.mubr.f32.mxu0 0.0
    %886 = vmatmul.mubr.f32.gmra.mrb[0].mxu0 %v770
    %v887 = vpop.f32.mrb[0].mxu0
    %v888 = vadd.f32 0.0, %v887
    %v889 = vpop.f32.mrb[0].mxu0
    %890 = vmatprep.mubr.f32.mxu0 0.0
    %891 = vmatmul.mubr.f32.gmra.mrb[0].mxu0 %v773
    %v892 = vpop.f32.mrb[0].mxu0
    %v893 = vadd.f32 0.0, %v892
    %v894 = vpop.f32.mrb[0].mxu0
    %895 = vmatprep.mubr.f32.mxu0 0.0
    %896 = vmatmul.mubr.f32.gmra.mrb[0].mxu0 %v776
    %v897 = vpop.f32.mrb[0].mxu0
    %v898 = vadd.f32 0.0, %v897
    %v899 = vpop.f32.mrb[0].mxu0
    %900 = vmatprep.mubr.f32.mxu0 0.0
    %901 = vmatmul.mubr.f32.gmra.mrb[0].mxu0 %v779
    %v902 = vpop.f32.mrb[0].mxu0
    %v903 = vadd.f32 0.0, %v902
    %v904 = vpop.f32.mrb[0].mxu0
    %905 = vmatprep.mubr.f32.mxu0 0.0
    %906 = vmatmul.mubr.f32.gmra.mrb[0].mxu0 %v782
    %v907 = vpop.f32.mrb[0].mxu0
    %v908 = vadd.f32 0.0, %v907
    %v909 = vpop.f32.mrb[0].mxu0
    %910 = vmatprep.mubr.f32.mxu0 0.0
    %911 = vmatmul.mubr.f32.gmra.mrb[0].mxu0 %v785
    %v912 = vpop.f32.mrb[0].mxu0
    %v913 = vadd.f32 0.0, %v912
    %v914 = vpop.f32.mrb[0].mxu0
    %915 = vmatprep.mubr.f32.mxu0 0.0
    %916 = vmatmul.mubr.f32.gmra.mrb[0].mxu0 %v788
    %v917 = vpop.f32.mrb[0].mxu0
    %v918 = vadd.f32 0.0, %v917
    %v919 = vpop.f32.mrb[0].mxu0
    %920 = vmatprep.mubr.f32.mxu0 0.0
    %921 = vmatmul.mubr.f32.gmra.mrb[0].mxu0 %v791
    %v922 = vpop.f32.mrb[0].mxu0
    %v923 = vadd.f32 0.0, %v922
    %v924 = vpop.f32.mrb[0].mxu0
    %925 = vmatprep.mubr.f32.mxu0 0.0
    %926 = vmatmul.mubr.f32.gmra.mrb[0].mxu0 %v794
    %v927 = vpop.f32.mrb[0].mxu0
    %v928 = vadd.f32 0.0, %v927
    %v929 = vpop.f32.mrb[0].mxu0
    %930 = vmatprep.mubr.f32.mxu0 0.0
    %931 = vmatmul.mubr.f32.gmra.mrb[0].mxu0 %v797
    %v932 = vpop.f32.mrb[0].mxu0
    %v933 = vadd.f32 0.0, %v932
    %v934 = vpop.f32.mrb[0].mxu0
    %935 = vmatprep.mubr.f32.mxu0 0.0
    %936 = vmatmul.mubr.f32.gmra.mrb[0].mxu0 %v800
    %v937 = vpop.f32.mrb[0].mxu0
    %v938 = vadd.f32 0.0, %v937
    %v939 = vpop.f32.mrb[0].mxu0
    %940 = vmatprep.mubr.f32.mxu0 0.0
    %941 = vmatmul.mubr.f32.gmra.mrb[0].mxu0 %v803
    %v942 = vpop.f32.mrb[0].mxu0
    %v943 = vadd.f32 0.0, %v942
    %v944 = vpop.f32.mrb[0].mxu0
    %945 = vmatprep.mubr.f32.mxu0 0.0
    %946 = vmatmul.mubr.f32.gmra.mrb[0].mxu0 %v806
    %v947 = vpop.f32.mrb[0].mxu0
    %v948 = vadd.f32 0.0, %v947
    %v949 = vpop.f32.mrb[0].mxu0
    %950 = vmatprep.mubr.f32.mxu0 0.0
    %951 = vmatmul.mubr.f32.gmra.mrb[0].mxu0 %v809
    %v952 = vpop.f32.mrb[0].mxu0
    %v953 = vadd.f32 0.0, %v952
    %v954 = vpop.f32.mrb[0].mxu0
    %955 = vdwg.mxu0
    %v956 = vmul.f32 %v448, %v878
    %v957 = vmul.f32 %v453, %v883
    %v958 = vmul.f32 %v458, %v888
    %v959 = vmul.f32 %v463, %v893
    %v960 = vmul.f32 %v468, %v898
    %v961 = vmul.f32 %v473, %v903
    %v962 = vmul.f32 %v478, %v908
    %v963 = vmul.f32 %v483, %v913
    %v964 = vmul.f32 %v488, %v918
    %v965 = vmul.f32 %v493, %v923
    %v966 = vmul.f32 %v498, %v928
    %v967 = vmul.f32 %v503, %v933
    %v968 = vmul.f32 %v508, %v938
    %v969 = vmul.f32 %v513, %v943
    %v970 = vmul.f32 %v518, %v948
    %v971 = vmul.f32 %v523, %v953
    %v972 = vpack.c.bf16 %v957, %v956
    %v973 = vpack.c.bf16 %v959, %v958
    %v974 = vpack.c.bf16 %v961, %v960
    %v975 = vpack.c.bf16 %v963, %v962
    %v976 = vpack.c.bf16 %v965, %v964
    %v977 = vpack.c.bf16 %v967, %v966
    %v978 = vpack.c.bf16 %v969, %v968
    %v979 = vpack.c.bf16 %v971, %v970
    %v988 = vunpack.c.l.b16 %v972
    %v989 = vunpack.c.h.b16 %v972
    %v990 = vunpack.c.l.b16 %v973
    %v991 = vunpack.c.h.b16 %v973
    %v992 = vunpack.c.l.b16 %v974
    %v993 = vunpack.c.h.b16 %v974
    %v994 = vunpack.c.l.b16 %v975
    %v995 = vunpack.c.h.b16 %v975
    %v996 = vunpack.c.l.b16 %v976
    %v997 = vunpack.c.h.b16 %v976
    %v998 = vunpack.c.l.b16 %v977
    %v999 = vunpack.c.h.b16 %v977
    %v1000 = vunpack.c.l.b16 %v978
    %v1001 = vunpack.c.h.b16 %v978
    %v1002 = vunpack.c.l.b16 %v979
    %v1003 = vunpack.c.h.b16 %v979
    %v1004 = vpack.c.b16 %v988, %v988
    %v1005 = vpack.c.b16 %v989, %v989
    %v1006 = vpack.c.b16 %v990, %v990
    %v1007 = vpack.c.b16 %v991, %v991
    %v1008 = vpack.c.b16 %v992, %v992
    %v1009 = vpack.c.b16 %v993, %v993
    %v1010 = vpack.c.b16 %v994, %v994
    %v1011 = vpack.c.b16 %v995, %v995
    %v1012 = vpack.c.b16 %v996, %v996
    %v1013 = vpack.c.b16 %v997, %v997
    %v1014 = vpack.c.b16 %v998, %v998
    %v1015 = vpack.c.b16 %v999, %v999
    %v1016 = vpack.c.b16 %v1000, %v1000
    %v1017 = vpack.c.b16 %v1001, %v1001
    %v1018 = vpack.c.b16 %v1002, %v1002
    %v1019 = vpack.c.b16 %v1003, %v1003
    %vm1036 = vcmask 27648
    %1037 = vst.msk [vmem:[%s7] sm:$0xf] %vm1036, %v1004
    %1038 = vst.msk [vmem:[%s7 + $0x4] sm:$0xf] %vm1036, %v1005
    %1039 = vst.msk [vmem:[%s7 + $0x8] sm:$0xf] %vm1036, %v1006
    %1040 = vst.msk [vmem:[%s7 + $0xc] sm:$0xf] %vm1036, %v1007
    %1041 = vst.msk [vmem:[%s7 + $0x10] sm:$0xf] %vm1036, %v1008
    %1042 = vst.msk [vmem:[%s7 + $0x14] sm:$0xf] %vm1036, %v1009
    %1043 = vst.msk [vmem:[%s7 + $0x18] sm:$0xf] %vm1036, %v1010
    %1044 = vst.msk [vmem:[%s7 + $0x1c] sm:$0xf] %vm1036, %v1011
    %1045 = vst.msk [vmem:[%s7 + $0x20] sm:$0xf] %vm1036, %v1012
    %1046 = vst.msk [vmem:[%s7 + $0x24] sm:$0xf] %vm1036, %v1013
    %1047 = vst.msk [vmem:[%s7 + $0x28] sm:$0xf] %vm1036, %v1014
    %1048 = vst.msk [vmem:[%s7 + $0x2c] sm:$0xf] %vm1036, %v1015
    %1049 = vst.msk [vmem:[%s7 + $0x30] sm:$0xf] %vm1036, %v1016
    %1050 = vst.msk [vmem:[%s7 + $0x34] sm:$0xf] %vm1036, %v1017
    %1051 = vst.msk [vmem:[%s7 + $0x38] sm:$0xf] %vm1036, %v1018
    %1052 = vst.msk [vmem:[%s7 + $0x3c] sm:$0xf] %vm1036, %v1019
  $region37: #{_lambda_.2} parent=0 // pred_fallthru
    _
  // Predicated region
  $region38: #{_lambda_.2} parent=0 // pred_check
    _
  $region39: #{_lambda_.2} parent=0 // pred_check_branch
    %1054 = sbr.rel (0) target = $region41
  $region40: #{_lambda_.2} parent=0 // pred_region
    _
  $region41: #{_lambda_.2} parent=0 // pred_fallthru
    _
  // Predicated region
  $region42: #{_lambda_.2} parent=0 // pred_check
    _
  $region43: #{_lambda_.2} parent=0 // pred_check_branch
    %1056 = sbr.rel (0) target = $region45
  $region44: #{_lambda_.2} parent=0 // pred_region
    _
  $region45: #{_lambda_.2} parent=0 // pred_fallthru
    _

// kernel: _lambda_.3
$region0: #{_lambda_.3}
  #allocation0 [shape = 'u32[]', space=smem, size = 0x4, offset = 0x4, fixed_abs, tag = 'smem constant byte address 0x4 - core index']
  #allocation1 [shape = 'u32[144,128]{1,0:T(1,128)}', space=vmem, size = 0x12000, scoped, tag = 'internal scratch']
  #allocation2 [shape = 'f32[128,4]{1,0:T(8,128)}', space=vmem, size = 0x10000, scoped, tag = 'scratch operand']
  %s0 = inlined_call_operand.vmem [shape: s8[128,128], index: 0, kind: input, shape index: {}]
  %s1 = inlined_call_operand.vmem [shape: bf16[128,4], index: 1, kind: input, shape index: {}]
  %s2 = inlined_call_operand.vmem [shape: f32[128,1], index: 2, kind: input, shape index: {}]
  %s3 = inlined_call_operand.vmem [shape: f32[1,4], index: 3, kind: input, shape index: {}]
  %s4 = inlined_call_operand.vmem [shape: f32[128,4], index: 4, kind: output, shape index: {}]
  %s5 = sld [smem:[#allocation0]]
  $region34: #{_lambda_.3} parent=0
    _
  %s7 = ssub.s32 1, %s5
  %s8 = scalar_select 0, %s7, %s5
  // Predicated region
  $region2: #{_lambda_.3} parent=0 // pred_check
    _
  $region3: #{_lambda_.3} parent=0 // pred_check_branch
    %10 = sbr.rel (0) target = $region5
  $region4: #{_lambda_.3} parent=0 // pred_region
    _
  $region5: #{_lambda_.3} parent=0 // pred_fallthru
    _
  // Predicated region
  $region6: #{_lambda_.3} parent=0 // pred_check
    _
  $region7: #{_lambda_.3} parent=0 // pred_check_branch
    %12 = sbr.rel (0) target = $region9
  $region8: #{_lambda_.3} parent=0 // pred_region
    _
  $region9: #{_lambda_.3} parent=0 // pred_fallthru
    _
  // Predicated region
  $region10: #{_lambda_.3} parent=0 // pred_check
    _
  $region11: #{_lambda_.3} parent=0 // pred_check_branch
    %14 = sbr.rel (0) target = $region13
  $region12: #{_lambda_.3} parent=0 // pred_region
    _
  $region13: #{_lambda_.3} parent=0 // pred_fallthru
    _
  // Predicated region
  $region14: #{_lambda_.3} parent=0 // pred_check
    _
  $region15: #{_lambda_.3} parent=0 // pred_check_branch
    %16 = sbr.rel (0) target = $region17
  $region16: #{_lambda_.3} parent=0 // pred_region
    _
  $region17: #{_lambda_.3} parent=0 // pred_fallthru
    _
  %p18 = scmp.eq.s32.totalorder 0, 0
  // Predicated region
  $region18: #{_lambda_.3} parent=0 // pred_check
    %p19 = pneg %p18
  $region19: #{_lambda_.3} parent=0 // pred_check_branch
    %21 = sbr.rel (%p19) target = $region21
  $region20: #{_lambda_.3} parent=0 // pred_region
    %vm22 = vcmask 31744
    %23 = vst.msk [vmem:[#allocation2] sm:$0xff] %vm22, 0.0
    %24 = vst.msk [vmem:[#allocation2 + $0x8] sm:$0xff] %vm22, 0.0
    %25 = vst.msk [vmem:[#allocation2 + $0x10] sm:$0xff] %vm22, 0.0
    %26 = vst.msk [vmem:[#allocation2 + $0x18] sm:$0xff] %vm22, 0.0
    %27 = vst.msk [vmem:[#allocation2 + $0x20] sm:$0xff] %vm22, 0.0
    %28 = vst.msk [vmem:[#allocation2 + $0x28] sm:$0xff] %vm22, 0.0
    %29 = vst.msk [vmem:[#allocation2 + $0x30] sm:$0xff] %vm22, 0.0
    %30 = vst.msk [vmem:[#allocation2 + $0x38] sm:$0xff] %vm22, 0.0
    %31 = vst.msk [vmem:[#allocation2 + $0x40] sm:$0xff] %vm22, 0.0
    %32 = vst.msk [vmem:[#allocation2 + $0x48] sm:$0xff] %vm22, 0.0
    %33 = vst.msk [vmem:[#allocation2 + $0x50] sm:$0xff] %vm22, 0.0
    %34 = vst.msk [vmem:[#allocation2 + $0x58] sm:$0xff] %vm22, 0.0
    %35 = vst.msk [vmem:[#allocation2 + $0x60] sm:$0xff] %vm22, 0.0
    %36 = vst.msk [vmem:[#allocation2 + $0x68] sm:$0xff] %vm22, 0.0
    %37 = vst.msk [vmem:[#allocation2 + $0x70] sm:$0xff] %vm22, 0.0
    %38 = vst.msk [vmem:[#allocation2 + $0x78] sm:$0xff] %vm22, 0.0
  $region21: #{_lambda_.3} parent=0 // pred_fallthru
    _
  %v39 = vld [vmem:[%s0] sm:$0x3]
  %v40 = vld [vmem:[%s0 + $0x2] sm:$0x3]
  %v41 = vld [vmem:[%s0 + $0x4] sm:$0x3]
  %v42 = vld [vmem:[%s0 + $0x6] sm:$0x3]
  %v43 = vld [vmem:[%s0 + $0x8] sm:$0x3]
  %v44 = vld [vmem:[%s0 + $0xa] sm:$0x3]
  %v45 = vld [vmem:[%s0 + $0xc] sm:$0x3]
  %v46 = vld [vmem:[%s0 + $0xe] sm:$0x3]
  %v47 = vld [vmem:[%s0 + $0x10] sm:$0x3]
  %v48 = vld [vmem:[%s0 + $0x12] sm:$0x3]
  %v49 = vld [vmem:[%s0 + $0x14] sm:$0x3]
  %v50 = vld [vmem:[%s0 + $0x16] sm:$0x3]
  %v51 = vld [vmem:[%s0 + $0x18] sm:$0x3]
  %v52 = vld [vmem:[%s0 + $0x1a] sm:$0x3]
  %v53 = vld [vmem:[%s0 + $0x1c] sm:$0x3]
  %v54 = vld [vmem:[%s0 + $0x1e] sm:$0x3]
  %v55 = vunpack.c.l.s8.bf16 %v39
  %v56 = vunpack.c.l.s8.bf16 %v40
  %v57 = vunpack.c.l.s8.bf16 %v41
  %v58 = vunpack.c.l.s8.bf16 %v42
  %v59 = vunpack.c.l.s8.bf16 %v43
  %v60 = vunpack.c.l.s8.bf16 %v44
  %v61 = vunpack.c.l.s8.bf16 %v45
  %v62 = vunpack.c.l.s8.bf16 %v46
  %v63 = vunpack.c.l.s8.bf16 %v47
  %v64 = vunpack.c.l.s8.bf16 %v48
  %v65 = vunpack.c.l.s8.bf16 %v49
  %v66 = vunpack.c.l.s8.bf16 %v50
  %v67 = vunpack.c.l.s8.bf16 %v51
  %v68 = vunpack.c.l.s8.bf16 %v52
  %v69 = vunpack.c.l.s8.bf16 %v53
  %v70 = vunpack.c.l.s8.bf16 %v54
  %v71 = vld [vmem:[#allocation2] sm:$0xff]
  %v72 = vld [vmem:[#allocation2 + $0x8] sm:$0xff]
  %v73 = vld [vmem:[#allocation2 + $0x10] sm:$0xff]
  %v74 = vld [vmem:[#allocation2 + $0x18] sm:$0xff]
  %v75 = vld [vmem:[#allocation2 + $0x20] sm:$0xff]
  %v76 = vld [vmem:[#allocation2 + $0x28] sm:$0xff]
  %v77 = vld [vmem:[#allocation2 + $0x30] sm:$0xff]
  %v78 = vld [vmem:[#allocation2 + $0x38] sm:$0xff]
  %v79 = vld [vmem:[#allocation2 + $0x40] sm:$0xff]
  %v80 = vld [vmem:[#allocation2 + $0x48] sm:$0xff]
  %v81 = vld [vmem:[#allocation2 + $0x50] sm:$0xff]
  %v82 = vld [vmem:[#allocation2 + $0x58] sm:$0xff]
  %v83 = vld [vmem:[#allocation2 + $0x60] sm:$0xff]
  %v84 = vld [vmem:[#allocation2 + $0x68] sm:$0xff]
  %v85 = vld [vmem:[#allocation2 + $0x70] sm:$0xff]
  %v86 = vld [vmem:[#allocation2 + $0x78] sm:$0xff]
  %v87 = vld [vmem:[%s1] sm:$0xf]
  %v88 = vld [vmem:[%s1 + $0x4] sm:$0xf]
  %v89 = vld [vmem:[%s1 + $0x8] sm:$0xf]
  %v90 = vld [vmem:[%s1 + $0xc] sm:$0xf]
  %v91 = vld [vmem:[%s1 + $0x10] sm:$0xf]
  %v92 = vld [vmem:[%s1 + $0x14] sm:$0xf]
  %v93 = vld [vmem:[%s1 + $0x18] sm:$0xf]
  %v94 = vld [vmem:[%s1 + $0x1c] sm:$0xf]
  %v95 = vld [vmem:[%s1 + $0x20] sm:$0xf]
  %v96 = vld [vmem:[%s1 + $0x24] sm:$0xf]
  %v97 = vld [vmem:[%s1 + $0x28] sm:$0xf]
  %v98 = vld [vmem:[%s1 + $0x2c] sm:$0xf]
  %v99 = vld [vmem:[%s1 + $0x30] sm:$0xf]
  %v100 = vld [vmem:[%s1 + $0x34] sm:$0xf]
  %v101 = vld [vmem:[%s1 + $0x38] sm:$0xf]
  %v102 = vld [vmem:[%s1 + $0x3c] sm:$0xf]
  %v119 = vunpack.c.l.b16 %v55
  %v120 = vunpack.c.l.b16 %v56
  %v121 = vunpack.c.l.b16 %v57
  %v122 = vunpack.c.l.b16 %v58
  %v123 = vunpack.c.l.b16 %v59
  %v124 = vunpack.c.l.b16 %v60
  %v125 = vunpack.c.l.b16 %v61
  %v126 = vunpack.c.l.b16 %v62
  %v127 = vunpack.c.l.b16 %v63
  %v128 = vunpack.c.l.b16 %v64
  %v129 = vunpack.c.l.b16 %v65
  %v130 = vunpack.c.l.b16 %v66
  %v131 = vunpack.c.l.b16 %v67
  %v132 = vunpack.c.l.b16 %v68
  %v133 = vunpack.c.l.b16 %v69
  %v134 = vunpack.c.l.b16 %v70
  %v135 = vpack.c.b16 %v120, %v119
  %v136 = vpack.c.b16 %v122, %v121
  %v137 = vpack.c.b16 %v124, %v123
  %v138 = vpack.c.b16 %v126, %v125
  %v139 = vpack.c.b16 %v128, %v127
  %v140 = vpack.c.b16 %v130, %v129
  %v141 = vpack.c.b16 %v132, %v131
  %v142 = vpack.c.b16 %v134, %v133
  %v167 = vunpack.c.l.b16 %v87
  %v168 = vunpack.c.l.b16 %v88
  %v169 = vunpack.c.l.b16 %v89
  %v170 = vunpack.c.l.b16 %v90
  %v171 = vunpack.c.l.b16 %v91
  %v172 = vunpack.c.l.b16 %v92
  %v173 = vunpack.c.l.b16 %v93
  %v174 = vunpack.c.l.b16 %v94
  %v175 = vunpack.c.l.b16 %v95
  %v176 = vunpack.c.l.b16 %v96
  %v177 = vunpack.c.l.b16 %v97
  %v178 = vunpack.c.l.b16 %v98
  %v179 = vunpack.c.l.b16 %v99
  %v180 = vunpack.c.l.b16 %v100
  %v181 = vunpack.c.l.b16 %v101
  %v182 = vunpack.c.l.b16 %v102
  %v183 = vpack.c.b16 %v168, %v167
  %v184 = vpack.c.b16 %v170, %v169
  %v185 = vpack.c.b16 %v172, %v171
  %v186 = vpack.c.b16 %v174, %v173
  %v187 = vpack.c.b16 %v176, %v175
  %v188 = vpack.c.b16 %v178, %v177
  %v189 = vpack.c.b16 %v180, %v179
  %v190 = vpack.c.b16 %v182, %v181
  %199 = vmatprep.subr.bf16.mxu0 0
  %200 = vmatpush1.bf16.msra.mxu0 %v183
  %201 = vmatprep.subr.bf16.mxu0 0
  %202 = vmatpush1.bf16.msra.mxu0 %v184
  %203 = vmatprep.subr.bf16.mxu0 0
  %204 = vmatpush1.bf16.msra.mxu0 %v185
  %205 = vmatprep.subr.bf16.mxu0 0
  %206 = vmatpush1.bf16.msra.mxu0 %v186
  %207 = vmatprep.subr.bf16.mxu0 0
  %208 = vmatpush1.bf16.msra.mxu0 %v187
  %209 = vmatprep.subr.bf16.mxu0 0
  %210 = vmatpush1.bf16.msra.mxu0 %v188
  %211 = vmatprep.subr.bf16.mxu0 0
  %212 = vmatpush1.bf16.msra.mxu0 %v189
  %213 = vmatprep.subr.bf16.mxu0 0
  %214 = vmatpush1.bf16.msra.mxu0 %v190
  %215 = vmatprep.subr.bf16.mxu0 0
  %216 = vmatpush1.bf16.msra.mxu0 0
  %217 = vmatprep.subr.bf16.mxu0 0
  %218 = vmatpush1.bf16.msra.mxu0 0
  %219 = vmatprep.subr.bf16.mxu0 0
  %220 = vmatpush1.bf16.msra.mxu0 0
  %221 = vmatprep.subr.bf16.mxu0 0
  %222 = vmatpush1.bf16.msra.mxu0 0
  %223 = vmatprep.subr.bf16.mxu0 0
  %224 = vmatpush1.bf16.msra.mxu0 0
  %225 = vmatprep.subr.bf16.mxu0 0
  %226 = vmatpush1.bf16.msra.mxu0 0
  %227 = vmatprep.subr.bf16.mxu0 0
  %228 = vmatpush1.bf16.msra.mxu0 0
  %229 = vmatprep.subr.bf16.mxu0 0
  %230 = vmatpush1.bf16.msra.mxu0 0
  %231 = vmatprep.mubr.bf16.mxu0 0
  %232 = vmatmul.mubr.bf16.gmra.mrb[0].mxu0 %v135
  %v233 = vpop.f32.mrb[0].mxu0
  %v234 = vadd.f32 0.0, %v233
  %v235 = vpop.f32.mrb[0].mxu0
  %v236 = vpop.f32.mrb[0].mxu0
  %v237 = vadd.f32 0.0, %v236
  %v238 = vpop.f32.mrb[0].mxu0
  %239 = vmatprep.mubr.bf16.mxu0 0
  %240 = vmatmul.mubr.bf16.gmra.mrb[0].mxu0 %v136
  %v241 = vpop.f32.mrb[0].mxu0
  %v242 = vadd.f32 0.0, %v241
  %v243 = vpop.f32.mrb[0].mxu0
  %v244 = vpop.f32.mrb[0].mxu0
  %v245 = vadd.f32 0.0, %v244
  %v246 = vpop.f32.mrb[0].mxu0
  %247 = vmatprep.mubr.bf16.mxu0 0
  %248 = vmatmul.mubr.bf16.gmra.mrb[0].mxu0 %v137
  %v249 = vpop.f32.mrb[0].mxu0
  %v250 = vadd.f32 0.0, %v249
  %v251 = vpop.f32.mrb[0].mxu0
  %v252 = vpop.f32.mrb[0].mxu0
  %v253 = vadd.f32 0.0, %v252
  %v254 = vpop.f32.mrb[0].mxu0
  %255 = vmatprep.mubr.bf16.mxu0 0
  %256 = vmatmul.mubr.bf16.gmra.mrb[0].mxu0 %v138
  %v257 = vpop.f32.mrb[0].mxu0
  %v258 = vadd.f32 0.0, %v257
  %v259 = vpop.f32.mrb[0].mxu0
  %v260 = vpop.f32.mrb[0].mxu0
  %v261 = vadd.f32 0.0, %v260
  %v262 = vpop.f32.mrb[0].mxu0
  %263 = vmatprep.mubr.bf16.mxu0 0
  %264 = vmatmul.mubr.bf16.gmra.mrb[0].mxu0 %v139
  %v265 = vpop.f32.mrb[0].mxu0
  %v266 = vadd.f32 0.0, %v265
  %v267 = vpop.f32.mrb[0].mxu0
  %v268 = vpop.f32.mrb[0].mxu0
  %v269 = vadd.f32 0.0, %v268
  %v270 = vpop.f32.mrb[0].mxu0
  %271 = vmatprep.mubr.bf16.mxu0 0
  %272 = vmatmul.mubr.bf16.gmra.mrb[0].mxu0 %v140
  %v273 = vpop.f32.mrb[0].mxu0
  %v274 = vadd.f32 0.0, %v273
  %v275 = vpop.f32.mrb[0].mxu0
  %v276 = vpop.f32.mrb[0].mxu0
  %v277 = vadd.f32 0.0, %v276
  %v278 = vpop.f32.mrb[0].mxu0
  %279 = vmatprep.mubr.bf16.mxu0 0
  %280 = vmatmul.mubr.bf16.gmra.mrb[0].mxu0 %v141
  %v281 = vpop.f32.mrb[0].mxu0
  %v282 = vadd.f32 0.0, %v281
  %v283 = vpop.f32.mrb[0].mxu0
  %v284 = vpop.f32.mrb[0].mxu0
  %v285 = vadd.f32 0.0, %v284
  %v286 = vpop.f32.mrb[0].mxu0
  %287 = vmatprep.mubr.bf16.mxu0 0
  %288 = vmatmul.mubr.bf16.gmra.mrb[0].mxu0 %v142
  %v289 = vpop.f32.mrb[0].mxu0
  %v290 = vadd.f32 0.0, %v289
  %v291 = vpop.f32.mrb[0].mxu0
  %v292 = vpop.f32.mrb[0].mxu0
  %v293 = vadd.f32 0.0, %v292
  %v294 = vpop.f32.mrb[0].mxu0
  %295 = vdwg.mxu0
  %v296 = vadd.f32 %v71, %v234
  %v297 = vadd.f32 %v72, %v237
  %v298 = vadd.f32 %v73, %v242
  %v299 = vadd.f32 %v74, %v245
  %v300 = vadd.f32 %v75, %v250
  %v301 = vadd.f32 %v76, %v253
  %v302 = vadd.f32 %v77, %v258
  %v303 = vadd.f32 %v78, %v261
  %v304 = vadd.f32 %v79, %v266
  %v305 = vadd.f32 %v80, %v269
  %v306 = vadd.f32 %v81, %v274
  %v307 = vadd.f32 %v82, %v277
  %v308 = vadd.f32 %v83, %v282
  %v309 = vadd.f32 %v84, %v285
  %v310 = vadd.f32 %v85, %v290
  %v311 = vadd.f32 %v86, %v293
  %vm312 = vcmask 31744
  %313 = vst.msk [vmem:[#allocation2] sm:$0xff] %vm312, %v296
  %314 = vst.msk [vmem:[#allocation2 + $0x8] sm:$0xff] %vm312, %v297
  %315 = vst.msk [vmem:[#allocation2 + $0x10] sm:$0xff] %vm312, %v298
  %316 = vst.msk [vmem:[#allocation2 + $0x18] sm:$0xff] %vm312, %v299
  %317 = vst.msk [vmem:[#allocation2 + $0x20] sm:$0xff] %vm312, %v300
  %318 = vst.msk [vmem:[#allocation2 + $0x28] sm:$0xff] %vm312, %v301
  %319 = vst.msk [vmem:[#allocation2 + $0x30] sm:$0xff] %vm312, %v302
  %320 = vst.msk [vmem:[#allocation2 + $0x38] sm:$0xff] %vm312, %v303
  %321 = vst.msk [vmem:[#allocation2 + $0x40] sm:$0xff] %vm312, %v304
  %322 = vst.msk [vmem:[#allocation2 + $0x48] sm:$0xff] %vm312, %v305
  %323 = vst.msk [vmem:[#allocation2 + $0x50] sm:$0xff] %vm312, %v306
  %324 = vst.msk [vmem:[#allocation2 + $0x58] sm:$0xff] %vm312, %v307
  %325 = vst.msk [vmem:[#allocation2 + $0x60] sm:$0xff] %vm312, %v308
  %326 = vst.msk [vmem:[#allocation2 + $0x68] sm:$0xff] %vm312, %v309
  %327 = vst.msk [vmem:[#allocation2 + $0x70] sm:$0xff] %vm312, %v310
  %328 = vst.msk [vmem:[#allocation2 + $0x78] sm:$0xff] %vm312, %v311
  // Predicated region
  $region22: #{_lambda_.3} parent=0 // pred_check
    %p329 = pneg %p18
  $region23: #{_lambda_.3} parent=0 // pred_check_branch
    %331 = sbr.rel (%p329) target = $region25
  $region24: #{_lambda_.3} parent=0 // pred_region
    %v332 = vld [vmem:[%s2] sm:$0xff]
    %v333 = vld [vmem:[%s2 + $0x8] sm:$0xff]
    %v334 = vld [vmem:[%s2 + $0x10] sm:$0xff]
    %v335 = vld [vmem:[%s2 + $0x18] sm:$0xff]
    %v336 = vld [vmem:[%s2 + $0x20] sm:$0xff]
    %v337 = vld [vmem:[%s2 + $0x28] sm:$0xff]
    %v338 = vld [vmem:[%s2 + $0x30] sm:$0xff]
    %v339 = vld [vmem:[%s2 + $0x38] sm:$0xff]
    %v340 = vld [vmem:[%s2 + $0x40] sm:$0xff]
    %v341 = vld [vmem:[%s2 + $0x48] sm:$0xff]
    %v342 = vld [vmem:[%s2 + $0x50] sm:$0xff]
    %v343 = vld [vmem:[%s2 + $0x58] sm:$0xff]
    %v344 = vld [vmem:[%s2 + $0x60] sm:$0xff]
    %v345 = vld [vmem:[%s2 + $0x68] sm:$0xff]
    %v346 = vld [vmem:[%s2 + $0x70] sm:$0xff]
    %v347 = vld [vmem:[%s2 + $0x78] sm:$0xff]
    %v348 = vld [vmem:[#allocation2] sm:$0xff]
    %v349 = vld [vmem:[#allocation2 + $0x8] sm:$0xff]
    %v350 = vld [vmem:[#allocation2 + $0x10] sm:$0xff]
    %v351 = vld [vmem:[#allocation2 + $0x18] sm:$0xff]
    %v352 = vld [vmem:[#allocation2 + $0x20] sm:$0xff]
    %v353 = vld [vmem:[#allocation2 + $0x28] sm:$0xff]
    %v354 = vld [vmem:[#allocation2 + $0x30] sm:$0xff]
    %v355 = vld [vmem:[#allocation2 + $0x38] sm:$0xff]
    %v356 = vld [vmem:[#allocation2 + $0x40] sm:$0xff]
    %v357 = vld [vmem:[#allocation2 + $0x48] sm:$0xff]
    %v358 = vld [vmem:[#allocation2 + $0x50] sm:$0xff]
    %v359 = vld [vmem:[#allocation2 + $0x58] sm:$0xff]
    %v360 = vld [vmem:[#allocation2 + $0x60] sm:$0xff]
    %v361 = vld [vmem:[#allocation2 + $0x68] sm:$0xff]
    %v362 = vld [vmem:[#allocation2 + $0x70] sm:$0xff]
    %v363 = vld [vmem:[#allocation2 + $0x78] sm:$0xff]
    %365 = vset.pattern.permute.xlu0 0
    %366 = vperm.xlu0 %365, %v332
    %v367 = vpop.permute.xlu0 %366
    %370 = vset.pattern.permute.xlu0 0
    %371 = vperm.xlu0 %370, %v333
    %v372 = vpop.permute.xlu0 %371
    %375 = vset.pattern.permute.xlu0 0
    %376 = vperm.xlu0 %375, %v334
    %v377 = vpop.permute.xlu0 %376
    %380 = vset.pattern.permute.xlu0 0
    %381 = vperm.xlu0 %380, %v335
    %v382 = vpop.permute.xlu0 %381
    %385 = vset.pattern.permute.xlu0 0
    %386 = vperm.xlu0 %385, %v336
    %v387 = vpop.permute.xlu0 %386
    %390 = vset.pattern.permute.xlu0 0
    %391 = vperm.xlu0 %390, %v337
    %v392 = vpop.permute.xlu0 %391
    %395 = vset.pattern.permute.xlu0 0
    %396 = vperm.xlu0 %395, %v338
    %v397 = vpop.permute.xlu0 %396
    %400 = vset.pattern.permute.xlu0 0
    %401 = vperm.xlu0 %400, %v339
    %v402 = vpop.permute.xlu0 %401
    %405 = vset.pattern.permute.xlu0 0
    %406 = vperm.xlu0 %405, %v340
    %v407 = vpop.permute.xlu0 %406
    %410 = vset.pattern.permute.xlu0 0
    %411 = vperm.xlu0 %410, %v341
    %v412 = vpop.permute.xlu0 %411
    %415 = vset.pattern.permute.xlu0 0
    %416 = vperm.xlu0 %415, %v342
    %v417 = vpop.permute.xlu0 %416
    %420 = vset.pattern.permute.xlu0 0
    %421 = vperm.xlu0 %420, %v343
    %v422 = vpop.permute.xlu0 %421
    %425 = vset.pattern.permute.xlu0 0
    %426 = vperm.xlu0 %425, %v344
    %v427 = vpop.permute.xlu0 %426
    %430 = vset.pattern.permute.xlu0 0
    %431 = vperm.xlu0 %430, %v345
    %v432 = vpop.permute.xlu0 %431
    %435 = vset.pattern.permute.xlu0 0
    %436 = vperm.xlu0 %435, %v346
    %v437 = vpop.permute.xlu0 %436
    %440 = vset.pattern.permute.xlu0 0
    %441 = vperm.xlu0 %440, %v347
    %v442 = vpop.permute.xlu0 %441
    %v444 = vmul.f32 %v367, %v348
    %v445 = vmul.f32 %v372, %v349
    %v446 = vmul.f32 %v377, %v350
    %v447 = vmul.f32 %v382, %v351
    %v448 = vmul.f32 %v387, %v352
    %v449 = vmul.f32 %v392, %v353
    %v450 = vmul.f32 %v397, %v354
    %v451 = vmul.f32 %v402, %v355
    %v452 = vmul.f32 %v407, %v356
    %v453 = vmul.f32 %v412, %v357
    %v454 = vmul.f32 %v417, %v358
    %v455 = vmul.f32 %v422, %v359
    %v456 = vmul.f32 %v427, %v360
    %v457 = vmul.f32 %v432, %v361
    %v458 = vmul.f32 %v437, %v362
    %v459 = vmul.f32 %v442, %v363
    %v460 = vld [vmem:[%s3] sm:$0x1]
    %v462 = vlaneseq
    %v463 = vshrl.u32 %v462, 7
    %v464 = vsub.s32 0, %v463
    %v465 = vrot.slane %v460, %v464
    %v467 = vadd.f32 %v444, %v465
    %v468 = vadd.f32 %v445, %v465
    %v469 = vadd.f32 %v446, %v465
    %v470 = vadd.f32 %v447, %v465
    %v471 = vadd.f32 %v448, %v465
    %v472 = vadd.f32 %v449, %v465
    %v473 = vadd.f32 %v450, %v465
    %v474 = vadd.f32 %v451, %v465
    %v475 = vadd.f32 %v452, %v465
    %v476 = vadd.f32 %v453, %v465
    %v477 = vadd.f32 %v454, %v465
    %v478 = vadd.f32 %v455, %v465
    %v479 = vadd.f32 %v456, %v465
    %v480 = vadd.f32 %v457, %v465
    %v481 = vadd.f32 %v458, %v465
    %v482 = vadd.f32 %v459, %v465
    %v483 = vsel %vm312, %v467, -inf
    %484 = vmax.xlane.f32.xlu0 %v483
    %v485 = vpop.xlane.xlu0 %484
    %v486 = vsel %vm312, %v468, -inf
    %487 = vmax.xlane.f32.xlu0 %v486
    %v488 = vpop.xlane.xlu0 %487
    %v489 = vsel %vm312, %v469, -inf
    %490 = vmax.xlane.f32.xlu0 %v489
    %v491 = vpop.xlane.xlu0 %490
    %v492 = vsel %vm312, %v470, -inf
    %493 = vmax.xlane.f32.xlu0 %v492
    %v494 = vpop.xlane.xlu0 %493
    %v495 = vsel %vm312, %v471, -inf
    %496 = vmax.xlane.f32.xlu0 %v495
    %v497 = vpop.xlane.xlu0 %496
    %v498 = vsel %vm312, %v472, -inf
    %499 = vmax.xlane.f32.xlu0 %v498
    %v500 = vpop.xlane.xlu0 %499
    %v501 = vsel %vm312, %v473, -inf
    %502 = vmax.xlane.f32.xlu0 %v501
    %v503 = vpop.xlane.xlu0 %502
    %v504 = vsel %vm312, %v474, -inf
    %505 = vmax.xlane.f32.xlu0 %v504
    %v506 = vpop.xlane.xlu0 %505
    %v507 = vsel %vm312, %v475, -inf
    %508 = vmax.xlane.f32.xlu0 %v507
    %v509 = vpop.xlane.xlu0 %508
    %v510 = vsel %vm312, %v476, -inf
    %511 = vmax.xlane.f32.xlu0 %v510
    %v512 = vpop.xlane.xlu0 %511
    %v513 = vsel %vm312, %v477, -inf
    %514 = vmax.xlane.f32.xlu0 %v513
    %v515 = vpop.xlane.xlu0 %514
    %v516 = vsel %vm312, %v478, -inf
    %517 = vmax.xlane.f32.xlu0 %v516
    %v518 = vpop.xlane.xlu0 %517
    %v519 = vsel %vm312, %v479, -inf
    %520 = vmax.xlane.f32.xlu0 %v519
    %v521 = vpop.xlane.xlu0 %520
    %v522 = vsel %vm312, %v480, -inf
    %523 = vmax.xlane.f32.xlu0 %v522
    %v524 = vpop.xlane.xlu0 %523
    %v525 = vsel %vm312, %v481, -inf
    %526 = vmax.xlane.f32.xlu0 %v525
    %v527 = vpop.xlane.xlu0 %526
    %v528 = vsel %vm312, %v482, -inf
    %529 = vmax.xlane.f32.xlu0 %v528
    %v530 = vpop.xlane.xlu0 %529
    %v531 = vsub.f32 %v467, %v485
    %v532 = vsub.f32 %v468, %v488
    %v533 = vsub.f32 %v469, %v491
    %v534 = vsub.f32 %v470, %v494
    %v535 = vsub.f32 %v471, %v497
    %v536 = vsub.f32 %v472, %v500
    %v537 = vsub.f32 %v473, %v503
    %v538 = vsub.f32 %v474, %v506
    %v539 = vsub.f32 %v475, %v509
    %v540 = vsub.f32 %v476, %v512
    %v541 = vsub.f32 %v477, %v515
    %v542 = vsub.f32 %v478, %v518
    %v543 = vsub.f32 %v479, %v521
    %v544 = vsub.f32 %v480, %v524
    %v545 = vsub.f32 %v481, %v527
    %v546 = vsub.f32 %v482, %v530
    %v547 = vmul.f32 %v531, 1.442695
    %v548 = vpow.pop %v547
    %v549 = vmul.f32 %v532, 1.442695
    %v550 = vpow.pop %v549
    %v551 = vmul.f32 %v533, 1.442695
    %v552 = vpow.pop %v551
    %v553 = vmul.f32 %v534, 1.442695
    %v554 = vpow.pop %v553
    %v555 = vmul.f32 %v535, 1.442695
    %v556 = vpow.pop %v555
    %v557 = vmul.f32 %v536, 1.442695
    %v558 = vpow.pop %v557
    %v559 = vmul.f32 %v537, 1.442695
    %v560 = vpow.pop %v559
    %v561 = vmul.f32 %v538, 1.442695
    %v562 = vpow.pop %v561
    %v563 = vmul.f32 %v539, 1.442695
    %v564 = vpow.pop %v563
    %v565 = vmul.f32 %v540, 1.442695
    %v566 = vpow.pop %v565
    %v567 = vmul.f32 %v541, 1.442695
    %v568 = vpow.pop %v567
    %v569 = vmul.f32 %v542, 1.442695
    %v570 = vpow.pop %v569
    %v571 = vmul.f32 %v543, 1.442695
    %v572 = vpow.pop %v571
    %v573 = vmul.f32 %v544, 1.442695
    %v574 = vpow.pop %v573
    %v575 = vmul.f32 %v545, 1.442695
    %v576 = vpow.pop %v575
    %v577 = vmul.f32 %v546, 1.442695
    %v578 = vpow.pop %v577
    %v579 = vsel %vm312, %v548, 0.0
    %580 = vadd.xlane.f32.xlu0 %v579
    %v581 = vpop.xlane.xlu0 %580
    %v582 = vsel %vm312, %v550, 0.0
    %583 = vadd.xlane.f32.xlu0 %v582
    %v584 = vpop.xlane.xlu0 %583
    %v585 = vsel %vm312, %v552, 0.0
    %586 = vadd.xlane.f32.xlu0 %v585
    %v587 = vpop.xlane.xlu0 %586
    %v588 = vsel %vm312, %v554, 0.0
    %589 = vadd.xlane.f32.xlu0 %v588
    %v590 = vpop.xlane.xlu0 %589
    %v591 = vsel %vm312, %v556, 0.0
    %592 = vadd.xlane.f32.xlu0 %v591
    %v593 = vpop.xlane.xlu0 %592
    %v594 = vsel %vm312, %v558, 0.0
    %595 = vadd.xlane.f32.xlu0 %v594
    %v596 = vpop.xlane.xlu0 %595
    %v597 = vsel %vm312, %v560, 0.0
    %598 = vadd.xlane.f32.xlu0 %v597
    %v599 = vpop.xlane.xlu0 %598
    %v600 = vsel %vm312, %v562, 0.0
    %601 = vadd.xlane.f32.xlu0 %v600
    %v602 = vpop.xlane.xlu0 %601
    %v603 = vsel %vm312, %v564, 0.0
    %604 = vadd.xlane.f32.xlu0 %v603
    %v605 = vpop.xlane.xlu0 %604
    %v606 = vsel %vm312, %v566, 0.0
    %607 = vadd.xlane.f32.xlu0 %v606
    %v608 = vpop.xlane.xlu0 %607
    %v609 = vsel %vm312, %v568, 0.0
    %610 = vadd.xlane.f32.xlu0 %v609
    %v611 = vpop.xlane.xlu0 %610
    %v612 = vsel %vm312, %v570, 0.0
    %613 = vadd.xlane.f32.xlu0 %v612
    %v614 = vpop.xlane.xlu0 %613
    %v615 = vsel %vm312, %v572, 0.0
    %616 = vadd.xlane.f32.xlu0 %v615
    %v617 = vpop.xlane.xlu0 %616
    %v618 = vsel %vm312, %v574, 0.0
    %619 = vadd.xlane.f32.xlu0 %v618
    %v620 = vpop.xlane.xlu0 %619
    %v621 = vsel %vm312, %v576, 0.0
    %622 = vadd.xlane.f32.xlu0 %v621
    %v623 = vpop.xlane.xlu0 %622
    %v624 = vsel %vm312, %v578, 0.0
    %625 = vadd.xlane.f32.xlu0 %v624
    %v626 = vpop.xlane.xlu0 %625
    %v627 = vlog2.pop %v581
    %v628 = vmul.f32 %v627, 0.6931472
    %v629 = vlog2.pop %v584
    %v630 = vmul.f32 %v629, 0.6931472
    %v631 = vlog2.pop %v587
    %v632 = vmul.f32 %v631, 0.6931472
    %v633 = vlog2.pop %v590
    %v634 = vmul.f32 %v633, 0.6931472
    %v635 = vlog2.pop %v593
    %v636 = vmul.f32 %v635, 0.6931472
    %v637 = vlog2.pop %v596
    %v638 = vmul.f32 %v637, 0.6931472
    %v639 = vlog2.pop %v599
    %v640 = vmul.f32 %v639, 0.6931472
    %v641 = vlog2.pop %v602
    %v642 = vmul.f32 %v641, 0.6931472
    %v643 = vlog2.pop %v605
    %v644 = vmul.f32 %v643, 0.6931472
    %v645 = vlog2.pop %v608
    %v646 = vmul.f32 %v645, 0.6931472
    %v647 = vlog2.pop %v611
    %v648 = vmul.f32 %v647, 0.6931472
    %v649 = vlog2.pop %v614
    %v650 = vmul.f32 %v649, 0.6931472
    %v651 = vlog2.pop %v617
    %v652 = vmul.f32 %v651, 0.6931472
    %v653 = vlog2.pop %v620
    %v654 = vmul.f32 %v653, 0.6931472
    %v655 = vlog2.pop %v623
    %v656 = vmul.f32 %v655, 0.6931472
    %v657 = vlog2.pop %v626
    %v658 = vmul.f32 %v657, 0.6931472
    %v659 = vsub.f32 %v531, %v628
    %v660 = vsub.f32 %v532, %v630
    %v661 = vsub.f32 %v533, %v632
    %v662 = vsub.f32 %v534, %v634
    %v663 = vsub.f32 %v535, %v636
    %v664 = vsub.f32 %v536, %v638
    %v665 = vsub.f32 %v537, %v640
    %v666 = vsub.f32 %v538, %v642
    %v667 = vsub.f32 %v539, %v644
    %v668 = vsub.f32 %v540, %v646
    %v669 = vsub.f32 %v541, %v648
    %v670 = vsub.f32 %v542, %v650
    %v671 = vsub.f32 %v543, %v652
    %v672 = vsub.f32 %v544, %v654
    %v673 = vsub.f32 %v545, %v656
    %v674 = vsub.f32 %v546, %v658
    %675 = vst.msk [vmem:[%s4] sm:$0xff] %vm312, %v659
    %676 = vst.msk [vmem:[%s4 + $0x8] sm:$0xff] %vm312, %v660
    %677 = vst.msk [vmem:[%s4 + $0x10] sm:$0xff] %vm312, %v661
    %678 = vst.msk [vmem:[%s4 + $0x18] sm:$0xff] %vm312, %v662
    %679 = vst.msk [vmem:[%s4 + $0x20] sm:$0xff] %vm312, %v663
    %680 = vst.msk [vmem:[%s4 + $0x28] sm:$0xff] %vm312, %v664
    %681 = vst.msk [vmem:[%s4 + $0x30] sm:$0xff] %vm312, %v665
    %682 = vst.msk [vmem:[%s4 + $0x38] sm:$0xff] %vm312, %v666
    %683 = vst.msk [vmem:[%s4 + $0x40] sm:$0xff] %vm312, %v667
    %684 = vst.msk [vmem:[%s4 + $0x48] sm:$0xff] %vm312, %v668
    %685 = vst.msk [vmem:[%s4 + $0x50] sm:$0xff] %vm312, %v669
    %686 = vst.msk [vmem:[%s4 + $0x58] sm:$0xff] %vm312, %v670
    %687 = vst.msk [vmem:[%s4 + $0x60] sm:$0xff] %vm312, %v671
    %688 = vst.msk [vmem:[%s4 + $0x68] sm:$0xff] %vm312, %v672
    %689 = vst.msk [vmem:[%s4 + $0x70] sm:$0xff] %vm312, %v673
    %690 = vst.msk [vmem:[%s4 + $0x78] sm:$0xff] %vm312, %v674
  $region25: #{_lambda_.3} parent=0 // pred_fallthru
    _
  // Predicated region
  $region26: #{_lambda_.3} parent=0 // pred_check
    _
  $region27: #{_lambda_.3} parent=0 // pred_check_branch
    %692 = sbr.rel (0) target = $region29
  $region28: #{_lambda_.3} parent=0 // pred_region
    _
  $region29: #{_lambda_.3} parent=0 // pred_fallthru
    _
  // Predicated region
  $region30: #{_lambda_.3} parent=0 // pred_check
    _
  $region31: #{_lambda_.3} parent=0 // pred_check_branch
    %694 = sbr.rel (0) target = $region33
  $region32: #{_lambda_.3} parent=0 // pred_region
    _
  $region33: #{_lambda_.3} parent=0 // pred_fallthru
    _

</llo_original>
